<compile_context>
chip_gen: v5e
topology: v5e:2x2
jax: 0.10.0
libtpu: 0.0.40
codegen_flags: <defaults>
</compile_context>

<pallas_src>
import jax
import jax.numpy as jnp
from jax.experimental import pallas as pl
from jax.experimental.pallas import tpu as pltpu


# ----------------------------------------------------------------------------
# Kernel
# ----------------------------------------------------------------------------
def _rnn_hier_kernel(x_ref, wl_ref, bl_ref, wu_ref, bu_ref,
                     state_ref, stop_ref):
    S, N, E = x_ref.shape
    bf16 = jnp.bfloat16

    w_l = wl_ref[...]   # (2E, 4E)  bf16, columns ordered (i, f, o, g)
    b_l = bl_ref[...]   # (1, 4E)   f32  (= b_ih + b_hh, reordered)
    w_u = wu_ref[...]   # (2E, 5E)  bf16, columns ordered (i, f, o, stop, g)
    b_u = bu_ref[...]   # (1, 5E)   f32

    h_l = jnp.zeros((N, E), jnp.float32)
    c_l = jnp.zeros((N, E), jnp.float32)
    h_u = jnp.zeros((N, E), jnp.float32)
    c_u = jnp.zeros((N, E), jnp.float32)
    # stopness kept lane-broadcast over E columns so it multiplies states
    # directly (no per-step broadcast op on the critical path).
    stop = jnp.ones((N, E), jnp.float32)

    for m in range(S):  # static unroll over the (short) sequence
        keep = 1.0 - stop
        h_l = h_l * keep
        c_l = c_l * keep

        # ---- lower LSTM cell: one fused MXU op --------------------------
        zl = jnp.dot(
            jnp.concatenate([x_ref[m], h_l], axis=1).astype(bf16),
            w_l, preferred_element_type=jnp.float32) + b_l          # (N, 4E)
        sg = jax.nn.sigmoid(zl[:, :3 * E])       # i, f, o in one EUP pass
        g = jnp.tanh(zl[:, 3 * E:4 * E])         # g in one EUP pass
        c_l = sg[:, E:2 * E] * c_l + sg[:, :E] * g
        h_l = sg[:, 2 * E:3 * E] * jnp.tanh(c_l)

        # ---- upper LSTM cell + folded stop gate: one fused MXU op --------
        zu = jnp.dot(
            jnp.concatenate([h_l, h_u], axis=1).astype(bf16),
            w_u, preferred_element_type=jnp.float32) + b_u          # (N, 5E)
        sgu = jax.nn.sigmoid(zu[:, :4 * E])      # i, f, o, stop in one pass
        gu = jnp.tanh(zu[:, 4 * E:5 * E])
        stop = sgu[:, 3 * E:4 * E]               # (N, E), identical columns
        nc_u = sgu[:, E:2 * E] * c_u + sgu[:, :E] * gu
        nh_u = sgu[:, 2 * E:3 * E] * jnp.tanh(nc_u)
        h_u = stop * nh_u + (1.0 - stop) * h_u
        c_u = stop * nc_u + (1.0 - stop) * c_u

        # per-step column store (no list / concatenate epilogue)
        stop_ref[:, m:m + 1] = stop[:, 0:1]

    state_ref[...] = h_u


# ----------------------------------------------------------------------------
# Parameters (PyTorch-equivalent layout, weights pre-transposed to (in, out))
# ----------------------------------------------------------------------------
def init_params(key, embedding_size):
    E = embedding_size
    k = 1.0 / float(E) ** 0.5
    keys = jax.random.split(key, 10)
    u = lambda kk, shape: jax.random.uniform(kk, shape, jnp.float32, -k, k)
    return dict(
        w_ih_l=u(keys[0], (E, 4 * E)),  # torch gate order (i, f, g, o)
        w_hh_l=u(keys[1], (E, 4 * E)),
        b_ih_l=u(keys[2], (1, 4 * E)),
        b_hh_l=u(keys[3], (1, 4 * E)),
        w_ih_u=u(keys[4], (E, 4 * E)),
        w_hh_u=u(keys[5], (E, 4 * E)),
        b_ih_u=u(keys[6], (1, 4 * E)),
        b_hh_u=u(keys[7], (1, 4 * E)),
        w_stop=u(keys[8], (E, 1)),
        b_stop=u(keys[9], (1, 1)),
    )


def _fused_weights(params, E):
    """Build fused / reordered kernel weights from the PyTorch-layout params."""
    def reorder(w, order):  # reorder E-wide gate blocks along the last axis
        return jnp.concatenate([w[..., s * E:(s + 1) * E] for s in order], axis=-1)

    # lower cell: [x | h_l] -> gates, columns (i, f, o, g)   (torch: i,f,g,o)
    w_l = jnp.concatenate([params['w_ih_l'], params['w_hh_l']], axis=0)
    w_l = reorder(w_l, (0, 1, 3, 2))
    b_l = reorder(params['b_ih_l'] + params['b_hh_l'], (0, 1, 3, 2))

    # upper cell: [h_l | h_u] -> gates + stop, columns (i, f, o, stop, g).
    # The stop gate only sees h_l, so its h_u rows are zero; it is tiled to E
    # identical columns so the in-kernel stopness is already lane-broadcast.
    # NOTE: for large E, shrink this block and broadcast in-kernel instead.
    w_u4 = jnp.concatenate([params['w_ih_u'], params['w_hh_u']], axis=0)
    stop_cols = jnp.concatenate(
        [jnp.tile(params['w_stop'], (1, E)), jnp.zeros((E, E), jnp.float32)], axis=0)
    w_u = jnp.concatenate(
        [w_u4[:, 0:E], w_u4[:, E:2 * E], w_u4[:, 3 * E:4 * E],
         stop_cols, w_u4[:, 2 * E:3 * E]], axis=1)
    b_u4 = params['b_ih_u'] + params['b_hh_u']
    b_u = jnp.concatenate(
        [b_u4[:, 0:E], b_u4[:, E:2 * E], b_u4[:, 3 * E:4 * E],
         jnp.tile(params['b_stop'], (1, E)), b_u4[:, 2 * E:3 * E]], axis=1)

    # bf16 matmul operands; biases stay f32 (added post-matmul in f32).
    return (w_l.astype(jnp.bfloat16), b_l,
            w_u.astype(jnp.bfloat16), b_u)


# ----------------------------------------------------------------------------
# Wrapper
# ----------------------------------------------------------------------------
def rnn_hier_encoder(inputs, params, return_stopness=False):
    """Pallas implementation of RNNHierEncoder.forward (rnn_type='LSTM')."""
    S, N, E = inputs.shape
    w_l, b_l, w_u, b_u = _fused_weights(params, E)

    tile_n = 8 if N % 8 == 0 else N          # one sublane tile per grid step
    grid = (N // tile_n,)

    state, stop_ns = pl.pallas_call(
        _rnn_hier_kernel,
        grid=grid,
        in_specs=[
            pl.BlockSpec((S, tile_n, E), lambda b: (0, b, 0)),
            pl.BlockSpec(w_l.shape, lambda b: (0, 0)),
            pl.BlockSpec(b_l.shape, lambda b: (0, 0)),
            pl.BlockSpec(w_u.shape, lambda b: (0, 0)),
            pl.BlockSpec(b_u.shape, lambda b: (0, 0)),
        ],
        out_specs=(pl.BlockSpec((tile_n, E), lambda b: (b, 0)),
                   pl.BlockSpec((tile_n, S), lambda b: (b, 0))),
        out_shape=(jax.ShapeDtypeStruct((N, E), jnp.float32),
                   jax.ShapeDtypeStruct((N, S), jnp.float32)),
        compiler_params=pltpu.CompilerParams(
            dimension_semantics=("parallel",)),   # batch tiles -> both v7x TCs
    )(inputs, w_l, b_l, w_u, b_u)

    all_lower_stopness = stop_ns.T  # (S, N), matches torch output layout
    if return_stopness:
        return state, all_lower_stopness
    return state


# ----------------------------------------------------------------------------
# Pure-JAX references (module-structured; matmul_dtype mirrors the kernel)
# ----------------------------------------------------------------------------
def _lstm_cell_ref(x, h, c, w_ih, w_hh, b_ih, b_hh, E, mdt):
    gates = (jnp.dot(x.astype(mdt), w_ih.astype(mdt),
                     preferred_element_type=jnp.float32) + b_ih
             + jnp.dot(h.astype(mdt), w_hh.astype(mdt),
                       preferred_element_type=jnp.float32) + b_hh)
    i = jax.nn.sigmoid(gates[:, 0 * E:1 * E])
    f = jax.nn.sigmoid(gates[:, 1 * E:2 * E])
    g = jnp.tanh(gates[:, 2 * E:3 * E])
    o = jax.nn.sigmoid(gates[:, 3 * E:4 * E])
    c_new = f * c + i * g
    h_new = o * jnp.tanh(c_new)
    return h_new, c_new


def _reference(inputs, params, matmul_dtype=jnp.float32):
    """Mirrors the PyTorch forward (rnn_type='LSTM').  matmul_dtype=bfloat16
    mirrors the kernel's precision (bf16 matmul operands, f32 state math)."""
    S, N, E = inputs.shape
    h_l = jnp.zeros((N, E), jnp.float32)
    c_l = jnp.zeros((N, E), jnp.float32)
    h_u = jnp.zeros((N, E), jnp.float32)
    c_u = jnp.zeros((N, E), jnp.float32)
    stop = jnp.ones((N, 1), jnp.float32)
    all_stop = []
    for m in range(S):
        h_l = h_l * (1.0 - stop)
        c_l = c_l * (1.0 - stop)
        h_l, c_l = _lstm_cell_ref(inputs[m], h_l, c_l,
                                  params['w_ih_l'], params['w_hh_l'],
                                  params['b_ih_l'], params['b_hh_l'], E, matmul_dtype)
        stop = jax.nn.sigmoid(
            jnp.dot(h_l.astype(matmul_dtype), params['w_stop'].astype(matmul_dtype),
                    preferred_element_type=jnp.float32) + params['b_stop'])
        all_stop.append(stop[:, 0])
        nh_u, nc_u = _lstm_cell_ref(h_l, h_u, c_u,
                                    params['w_ih_u'], params['w_hh_u'],
                                    params['b_ih_u'], params['b_hh_u'], E, matmul_dtype)
        h_u = stop * nh_u + (1.0 - stop) * h_u
        c_u = stop * nc_u + (1.0 - stop) * c_u
    return h_u, jnp.stack(all_stop, axis=0)


# ----------------------------------------------------------------------------
if __name__ == "__main__":
    # seq_len, batch (2 x 8-row tiles -> 2 parallel grid steps), embedding
    S, N, E = 8, 16, 32
    key = jax.random.PRNGKey(0)
    k_param, k_input = jax.random.split(key)

    params = init_params(k_param, E)
    inputs = jax.random.normal(k_input, (S, N, E), dtype=jnp.float32)

    state, stopness = rnn_hier_encoder(inputs, params, return_stopness=True)
    state = jax.block_until_ready(state)
    stopness = jax.block_until_ready(stopness)

    assert state.shape == (N, E) and stopness.shape == (S, N)
    assert bool(jnp.all(jnp.isfinite(state))) and bool(jnp.all(jnp.isfinite(stopness)))

    # Tight check against a reference mirroring the kernel's precision choice
    # (bf16 matmul operands, f32 state / elementwise math).
    ref_state, ref_stop = _reference(inputs, params, matmul_dtype=jnp.bfloat16)
    assert jnp.allclose(state, ref_state, atol=5e-3, rtol=5e-3), (
        "state mismatch vs bf16-mirrored reference: max abs diff "
        f"{float(jnp.max(jnp.abs(state - ref_state)))}")
    assert jnp.allclose(stopness, ref_stop, atol=5e-3, rtol=5e-3), (
        "stopness mismatch vs bf16-mirrored reference: max abs diff "
        f"{float(jnp.max(jnp.abs(stopness - ref_stop)))}")

    # Looser check against the all-f32 module semantics (bf16 matmul envelope).
    ref_state32, ref_stop32 = _reference(inputs, params, matmul_dtype=jnp.float32)
    assert jnp.allclose(state, ref_state32, atol=3e-2, rtol=3e-2)
    assert jnp.allclose(stopness, ref_stop32, atol=3e-2, rtol=3e-2)

    print("KERNEL_OK")
</pallas_src>

<mosaic_0001>
module attributes {stable_mosaic.version = 11 : i64} {
  func.func @_rnn_hier_kernel(%arg0: i32, %arg1: memref<8x8x32xf32, #tpu.memory_space<vmem>>, %arg2: memref<64x128xbf16, #tpu.memory_space<vmem>>, %arg3: memref<1x128xf32, #tpu.memory_space<vmem>>, %arg4: memref<64x160xbf16, #tpu.memory_space<vmem>>, %arg5: memref<1x160xf32, #tpu.memory_space<vmem>>, %arg6: memref<8x32xf32, #tpu.memory_space<vmem>>, %arg7: memref<8x8xf32, #tpu.memory_space<vmem>>) attributes {dimension_semantics = [#tpu.dimension_semantics<parallel>], iteration_bounds = array<i64: 2>, scalar_prefetch = 0 : i64, scratch_operands = 0 : i64, tpu.core_type = #tpu.core_type<tc>, window_params = [{transform_indices = @transform_0, window_bounds = array<i64: 8, 8, 32>}, {pipeline_mode = #tpu.pipeline_mode<synchronous>, transform_indices = @transform_1, window_bounds = array<i64: 64, 128>}, {pipeline_mode = #tpu.pipeline_mode<synchronous>, transform_indices = @transform_2, window_bounds = array<i64: 1, 128>}, {pipeline_mode = #tpu.pipeline_mode<synchronous>, transform_indices = @transform_3, window_bounds = array<i64: 64, 160>}, {pipeline_mode = #tpu.pipeline_mode<synchronous>, transform_indices = @transform_4, window_bounds = array<i64: 1, 160>}, {transform_indices = @transform_5, window_bounds = array<i64: 8, 32>}, {transform_indices = @transform_6, window_bounds = array<i64: 8, 8>}]} {
    %c0 = arith.constant 0 : index
    %c0_0 = arith.constant 0 : index
    %0 = vector.load %arg2[%c0, %c0_0] : memref<64x128xbf16, #tpu.memory_space<vmem>>, vector<64x128xbf16>
    %c0_1 = arith.constant 0 : index
    %c0_2 = arith.constant 0 : index
    %1 = vector.load %arg3[%c0_1, %c0_2] : memref<1x128xf32, #tpu.memory_space<vmem>>, vector<1x128xf32>
    %c0_3 = arith.constant 0 : index
    %c0_4 = arith.constant 0 : index
    %2 = vector.load %arg4[%c0_3, %c0_4] : memref<64x160xbf16, #tpu.memory_space<vmem>>, vector<64x160xbf16>
    %c0_5 = arith.constant 0 : index
    %c0_6 = arith.constant 0 : index
    %3 = vector.load %arg5[%c0_5, %c0_6] : memref<1x160xf32, #tpu.memory_space<vmem>>, vector<1x160xf32>
    %cst = arith.constant 0.000000e+00 : f32
    %4 = vector.broadcast %cst : f32 to vector<8x32xf32>
    %cst_7 = arith.constant 0.000000e+00 : f32
    %5 = vector.broadcast %cst_7 : f32 to vector<8x32xf32>
    %cst_8 = arith.constant 0.000000e+00 : f32
    %6 = vector.broadcast %cst_8 : f32 to vector<8x32xf32>
    %cst_9 = arith.constant 0.000000e+00 : f32
    %7 = vector.broadcast %cst_9 : f32 to vector<8x32xf32>
    %cst_10 = arith.constant 1.000000e+00 : f32
    %8 = vector.broadcast %cst_10 : f32 to vector<8x32xf32>
    %cst_11 = arith.constant 1.000000e+00 : f32
    %9 = vector.broadcast %cst_11 : f32 to vector<8x32xf32>
    %10 = arith.subf %9, %8 : vector<8x32xf32>
    %11 = arith.mulf %4, %10 : vector<8x32xf32>
    %12 = arith.mulf %5, %10 : vector<8x32xf32>
    %c0_12 = arith.constant 0 : index
    %c0_13 = arith.constant 0 : index
    %c0_14 = arith.constant 0 : index
    %13 = vector.load %arg1[%c0_12, %c0_13, %c0_14] : memref<8x8x32xf32, #tpu.memory_space<vmem>>, vector<1x8x32xf32>
    %14 = vector.shape_cast %13 : vector<1x8x32xf32> to vector<8x32xf32>
    %15 = tpu.concatenate %14, %11 in 1 : vector<8x32xf32>, vector<8x32xf32> -> vector<8x64xf32>
    %16 = arith.truncf %15 : vector<8x64xf32> to vector<8x64xbf16>
    %cst_15 = arith.constant dense<0.000000e+00> : vector<8x128xf32>
    %17 = tpu.matmul %16, %0, %cst_15 {dimension_numbers = #tpu.dot_dimension_numbers<[1], [0], [0], [1], [0, 0, 1, 1], [], []>} : vector<8x64xbf16>, vector<64x128xbf16>, vector<8x128xf32> -> vector<8x128xf32>
    %18 = vector.broadcast %1 : vector<1x128xf32> to vector<8x128xf32>
    %19 = arith.addf %17, %18 : vector<8x128xf32>
    %20 = vector.extract_strided_slice %19 {offsets = [0, 0], sizes = [8, 96], strides = [1, 1]} : vector<8x128xf32> to vector<8x96xf32>
    %21 = arith.negf %20 : vector<8x96xf32>
    %22 = math.exp %21 : vector<8x96xf32>
    %cst_16 = arith.constant 1.000000e+00 : f32
    %23 = vector.broadcast %cst_16 : f32 to vector<8x96xf32>
    %24 = arith.addf %23, %22 : vector<8x96xf32>
    %25 = arith.divf %23, %24 : vector<8x96xf32>
    %26 = vector.extract_strided_slice %19 {offsets = [0, 96], sizes = [8, 32], strides = [1, 1]} : vector<8x128xf32> to vector<8x32xf32>
    %27 = math.tanh %26 : vector<8x32xf32>
    %28 = vector.extract_strided_slice %25 {offsets = [0, 32], sizes = [8, 32], strides = [1, 1]} : vector<8x96xf32> to vector<8x32xf32>
    %29 = arith.mulf %28, %12 : vector<8x32xf32>
    %30 = vector.extract_strided_slice %25 {offsets = [0, 0], sizes = [8, 32], strides = [1, 1]} : vector<8x96xf32> to vector<8x32xf32>
    %31 = arith.mulf %30, %27 : vector<8x32xf32>
    %32 = arith.addf %29, %31 : vector<8x32xf32>
    %33 = vector.extract_strided_slice %25 {offsets = [0, 64], sizes = [8, 32], strides = [1, 1]} : vector<8x96xf32> to vector<8x32xf32>
    %34 = math.tanh %32 : vector<8x32xf32>
    %35 = arith.mulf %33, %34 : vector<8x32xf32>
    %36 = tpu.concatenate %35, %6 in 1 : vector<8x32xf32>, vector<8x32xf32> -> vector<8x64xf32>
    %37 = arith.truncf %36 : vector<8x64xf32> to vector<8x64xbf16>
    %cst_17 = arith.constant dense<0.000000e+00> : vector<8x160xf32>
    %38 = tpu.matmul %37, %2, %cst_17 {dimension_numbers = #tpu.dot_dimension_numbers<[1], [0], [0], [1], [0, 0, 1, 1], [], []>} : vector<8x64xbf16>, vector<64x160xbf16>, vector<8x160xf32> -> vector<8x160xf32>
    %39 = vector.broadcast %3 : vector<1x160xf32> to vector<8x160xf32>
    %40 = arith.addf %38, %39 : vector<8x160xf32>
    %41 = vector.extract_strided_slice %40 {offsets = [0, 0], sizes = [8, 128], strides = [1, 1]} : vector<8x160xf32> to vector<8x128xf32>
    %42 = arith.negf %41 : vector<8x128xf32>
    %43 = math.exp %42 : vector<8x128xf32>
    %cst_18 = arith.constant 1.000000e+00 : f32
    %44 = vector.broadcast %cst_18 : f32 to vector<8x128xf32>
    %45 = arith.addf %44, %43 : vector<8x128xf32>
    %46 = arith.divf %44, %45 : vector<8x128xf32>
    %47 = vector.extract_strided_slice %40 {offsets = [0, 128], sizes = [8, 32], strides = [1, 1]} : vector<8x160xf32> to vector<8x32xf32>
    %48 = math.tanh %47 : vector<8x32xf32>
    %49 = vector.extract_strided_slice %46 {offsets = [0, 96], sizes = [8, 32], strides = [1, 1]} : vector<8x128xf32> to vector<8x32xf32>
    %50 = vector.extract_strided_slice %46 {offsets = [0, 32], sizes = [8, 32], strides = [1, 1]} : vector<8x128xf32> to vector<8x32xf32>
    %51 = arith.mulf %50, %7 : vector<8x32xf32>
    %52 = vector.extract_strided_slice %46 {offsets = [0, 0], sizes = [8, 32], strides = [1, 1]} : vector<8x128xf32> to vector<8x32xf32>
    %53 = arith.mulf %52, %48 : vector<8x32xf32>
    %54 = arith.addf %51, %53 : vector<8x32xf32>
    %55 = vector.extract_strided_slice %46 {offsets = [0, 64], sizes = [8, 32], strides = [1, 1]} : vector<8x128xf32> to vector<8x32xf32>
    %56 = math.tanh %54 : vector<8x32xf32>
    %57 = arith.mulf %55, %56 : vector<8x32xf32>
    %58 = arith.mulf %49, %57 : vector<8x32xf32>
    %cst_19 = arith.constant 1.000000e+00 : f32
    %59 = vector.broadcast %cst_19 : f32 to vector<8x32xf32>
    %60 = arith.subf %59, %49 : vector<8x32xf32>
    %61 = arith.mulf %60, %6 : vector<8x32xf32>
    %62 = arith.addf %58, %61 : vector<8x32xf32>
    %63 = arith.mulf %49, %54 : vector<8x32xf32>
    %cst_20 = arith.constant 1.000000e+00 : f32
    %64 = vector.broadcast %cst_20 : f32 to vector<8x32xf32>
    %65 = arith.subf %64, %49 : vector<8x32xf32>
    %66 = arith.mulf %65, %7 : vector<8x32xf32>
    %67 = arith.addf %63, %66 : vector<8x32xf32>
    %68 = vector.extract_strided_slice %49 {offsets = [0, 0], sizes = [8, 1], strides = [1, 1]} : vector<8x32xf32> to vector<8x1xf32>
    %c0_21 = arith.constant 0 : index
    %c0_22 = arith.constant 0 : index
    %69 = vector.load %arg7[%c0_21, %c0_22] : memref<8x8xf32, #tpu.memory_space<vmem>>, vector<8x1xf32>
    tpu.vector_store %arg7[%c0_21, %c0_22], %68 {strides = array<i32>} : memref<8x8xf32, #tpu.memory_space<vmem>>, vector<8x1xf32>,
    %cst_23 = arith.constant 1.000000e+00 : f32
    %70 = vector.broadcast %cst_23 : f32 to vector<8x32xf32>
    %71 = arith.subf %70, %49 : vector<8x32xf32>
    %72 = arith.mulf %35, %71 : vector<8x32xf32>
    %73 = arith.mulf %32, %71 : vector<8x32xf32>
    %c1 = arith.constant 1 : index
    %c0_24 = arith.constant 0 : index
    %c0_25 = arith.constant 0 : index
    %74 = vector.load %arg1[%c1, %c0_24, %c0_25] : memref<8x8x32xf32, #tpu.memory_space<vmem>>, vector<1x8x32xf32>
    %75 = vector.shape_cast %74 : vector<1x8x32xf32> to vector<8x32xf32>
    %76 = tpu.concatenate %75, %72 in 1 : vector<8x32xf32>, vector<8x32xf32> -> vector<8x64xf32>
    %77 = arith.truncf %76 : vector<8x64xf32> to vector<8x64xbf16>
    %cst_26 = arith.constant dense<0.000000e+00> : vector<8x128xf32>
    %78 = tpu.matmul %77, %0, %cst_26 {dimension_numbers = #tpu.dot_dimension_numbers<[1], [0], [0], [1], [0, 0, 1, 1], [], []>} : vector<8x64xbf16>, vector<64x128xbf16>, vector<8x128xf32> -> vector<8x128xf32>
    %79 = vector.broadcast %1 : vector<1x128xf32> to vector<8x128xf32>
    %80 = arith.addf %78, %79 : vector<8x128xf32>
    %81 = vector.extract_strided_slice %80 {offsets = [0, 0], sizes = [8, 96], strides = [1, 1]} : vector<8x128xf32> to vector<8x96xf32>
    %82 = arith.negf %81 : vector<8x96xf32>
    %83 = math.exp %82 : vector<8x96xf32>
    %cst_27 = arith.constant 1.000000e+00 : f32
    %84 = vector.broadcast %cst_27 : f32 to vector<8x96xf32>
    %85 = arith.addf %84, %83 : vector<8x96xf32>
    %86 = arith.divf %84, %85 : vector<8x96xf32>
    %87 = vector.extract_strided_slice %80 {offsets = [0, 96], sizes = [8, 32], strides = [1, 1]} : vector<8x128xf32> to vector<8x32xf32>
    %88 = math.tanh %87 : vector<8x32xf32>
    %89 = vector.extract_strided_slice %86 {offsets = [0, 32], sizes = [8, 32], strides = [1, 1]} : vector<8x96xf32> to vector<8x32xf32>
    %90 = arith.mulf %89, %73 : vector<8x32xf32>
    %91 = vector.extract_strided_slice %86 {offsets = [0, 0], sizes = [8, 32], strides = [1, 1]} : vector<8x96xf32> to vector<8x32xf32>
    %92 = arith.mulf %91, %88 : vector<8x32xf32>
    %93 = arith.addf %90, %92 : vector<8x32xf32>
    %94 = vector.extract_strided_slice %86 {offsets = [0, 64], sizes = [8, 32], strides = [1, 1]} : vector<8x96xf32> to vector<8x32xf32>
    %95 = math.tanh %93 : vector<8x32xf32>
    %96 = arith.mulf %94, %95 : vector<8x32xf32>
    %97 = tpu.concatenate %96, %62 in 1 : vector<8x32xf32>, vector<8x32xf32> -> vector<8x64xf32>
    %98 = arith.truncf %97 : vector<8x64xf32> to vector<8x64xbf16>
    %cst_28 = arith.constant dense<0.000000e+00> : vector<8x160xf32>
    %99 = tpu.matmul %98, %2, %cst_28 {dimension_numbers = #tpu.dot_dimension_numbers<[1], [0], [0], [1], [0, 0, 1, 1], [], []>} : vector<8x64xbf16>, vector<64x160xbf16>, vector<8x160xf32> -> vector<8x160xf32>
    %100 = vector.broadcast %3 : vector<1x160xf32> to vector<8x160xf32>
    %101 = arith.addf %99, %100 : vector<8x160xf32>
    %102 = vector.extract_strided_slice %101 {offsets = [0, 0], sizes = [8, 128], strides = [1, 1]} : vector<8x160xf32> to vector<8x128xf32>
    %103 = arith.negf %102 : vector<8x128xf32>
    %104 = math.exp %103 : vector<8x128xf32>
    %cst_29 = arith.constant 1.000000e+00 : f32
    %105 = vector.broadcast %cst_29 : f32 to vector<8x128xf32>
    %106 = arith.addf %105, %104 : vector<8x128xf32>
    %107 = arith.divf %105, %106 : vector<8x128xf32>
    %108 = vector.extract_strided_slice %101 {offsets = [0, 128], sizes = [8, 32], strides = [1, 1]} : vector<8x160xf32> to vector<8x32xf32>
    %109 = math.tanh %108 : vector<8x32xf32>
    %110 = vector.extract_strided_slice %107 {offsets = [0, 96], sizes = [8, 32], strides = [1, 1]} : vector<8x128xf32> to vector<8x32xf32>
    %111 = vector.extract_strided_slice %107 {offsets = [0, 32], sizes = [8, 32], strides = [1, 1]} : vector<8x128xf32> to vector<8x32xf32>
    %112 = arith.mulf %111, %67 : vector<8x32xf32>
    %113 = vector.extract_strided_slice %107 {offsets = [0, 0], sizes = [8, 32], strides = [1, 1]} : vector<8x128xf32> to vector<8x32xf32>
    %114 = arith.mulf %113, %109 : vector<8x32xf32>
    %115 = arith.addf %112, %114 : vector<8x32xf32>
    %116 = vector.extract_strided_slice %107 {offsets = [0, 64], sizes = [8, 32], strides = [1, 1]} : vector<8x128xf32> to vector<8x32xf32>
    %117 = math.tanh %115 : vector<8x32xf32>
    %118 = arith.mulf %116, %117 : vector<8x32xf32>
    %119 = arith.mulf %110, %118 : vector<8x32xf32>
    %cst_30 = arith.constant 1.000000e+00 : f32
    %120 = vector.broadcast %cst_30 : f32 to vector<8x32xf32>
    %121 = arith.subf %120, %110 : vector<8x32xf32>
    %122 = arith.mulf %121, %62 : vector<8x32xf32>
    %123 = arith.addf %119, %122 : vector<8x32xf32>
    %124 = arith.mulf %110, %115 : vector<8x32xf32>
    %cst_31 = arith.constant 1.000000e+00 : f32
    %125 = vector.broadcast %cst_31 : f32 to vector<8x32xf32>
    %126 = arith.subf %125, %110 : vector<8x32xf32>
    %127 = arith.mulf %126, %67 : vector<8x32xf32>
    %128 = arith.addf %124, %127 : vector<8x32xf32>
    %129 = vector.extract_strided_slice %110 {offsets = [0, 0], sizes = [8, 1], strides = [1, 1]} : vector<8x32xf32> to vector<8x1xf32>
    %c0_32 = arith.constant 0 : index
    %c1_33 = arith.constant 1 : index
    %130 = vector.load %arg7[%c0_32, %c1_33] : memref<8x8xf32, #tpu.memory_space<vmem>>, vector<8x1xf32>
    tpu.vector_store %arg7[%c0_32, %c1_33], %129 {strides = array<i32>} : memref<8x8xf32, #tpu.memory_space<vmem>>, vector<8x1xf32>,
    %cst_34 = arith.constant 1.000000e+00 : f32
    %131 = vector.broadcast %cst_34 : f32 to vector<8x32xf32>
    %132 = arith.subf %131, %110 : vector<8x32xf32>
    %133 = arith.mulf %96, %132 : vector<8x32xf32>
    %134 = arith.mulf %93, %132 : vector<8x32xf32>
    %c2 = arith.constant 2 : index
    %c0_35 = arith.constant 0 : index
    %c0_36 = arith.constant 0 : index
    %135 = vector.load %arg1[%c2, %c0_35, %c0_36] : memref<8x8x32xf32, #tpu.memory_space<vmem>>, vector<1x8x32xf32>
    %136 = vector.shape_cast %135 : vector<1x8x32xf32> to vector<8x32xf32>
    %137 = tpu.concatenate %136, %133 in 1 : vector<8x32xf32>, vector<8x32xf32> -> vector<8x64xf32>
    %138 = arith.truncf %137 : vector<8x64xf32> to vector<8x64xbf16>
    %cst_37 = arith.constant dense<0.000000e+00> : vector<8x128xf32>
    %139 = tpu.matmul %138, %0, %cst_37 {dimension_numbers = #tpu.dot_dimension_numbers<[1], [0], [0], [1], [0, 0, 1, 1], [], []>} : vector<8x64xbf16>, vector<64x128xbf16>, vector<8x128xf32> -> vector<8x128xf32>
    %140 = vector.broadcast %1 : vector<1x128xf32> to vector<8x128xf32>
    %141 = arith.addf %139, %140 : vector<8x128xf32>
    %142 = vector.extract_strided_slice %141 {offsets = [0, 0], sizes = [8, 96], strides = [1, 1]} : vector<8x128xf32> to vector<8x96xf32>
    %143 = arith.negf %142 : vector<8x96xf32>
    %144 = math.exp %143 : vector<8x96xf32>
    %cst_38 = arith.constant 1.000000e+00 : f32
    %145 = vector.broadcast %cst_38 : f32 to vector<8x96xf32>
    %146 = arith.addf %145, %144 : vector<8x96xf32>
    %147 = arith.divf %145, %146 : vector<8x96xf32>
    %148 = vector.extract_strided_slice %141 {offsets = [0, 96], sizes = [8, 32], strides = [1, 1]} : vector<8x128xf32> to vector<8x32xf32>
    %149 = math.tanh %148 : vector<8x32xf32>
    %150 = vector.extract_strided_slice %147 {offsets = [0, 32], sizes = [8, 32], strides = [1, 1]} : vector<8x96xf32> to vector<8x32xf32>
    %151 = arith.mulf %150, %134 : vector<8x32xf32>
    %152 = vector.extract_strided_slice %147 {offsets = [0, 0], sizes = [8, 32], strides = [1, 1]} : vector<8x96xf32> to vector<8x32xf32>
    %153 = arith.mulf %152, %149 : vector<8x32xf32>
    %154 = arith.addf %151, %153 : vector<8x32xf32>
    %155 = vector.extract_strided_slice %147 {offsets = [0, 64], sizes = [8, 32], strides = [1, 1]} : vector<8x96xf32> to vector<8x32xf32>
    %156 = math.tanh %154 : vector<8x32xf32>
    %157 = arith.mulf %155, %156 : vector<8x32xf32>
    %158 = tpu.concatenate %157, %123 in 1 : vector<8x32xf32>, vector<8x32xf32> -> vector<8x64xf32>
    %159 = arith.truncf %158 : vector<8x64xf32> to vector<8x64xbf16>
    %cst_39 = arith.constant dense<0.000000e+00> : vector<8x160xf32>
    %160 = tpu.matmul %159, %2, %cst_39 {dimension_numbers = #tpu.dot_dimension_numbers<[1], [0], [0], [1], [0, 0, 1, 1], [], []>} : vector<8x64xbf16>, vector<64x160xbf16>, vector<8x160xf32> -> vector<8x160xf32>
    %161 = vector.broadcast %3 : vector<1x160xf32> to vector<8x160xf32>
    %162 = arith.addf %160, %161 : vector<8x160xf32>
    %163 = vector.extract_strided_slice %162 {offsets = [0, 0], sizes = [8, 128], strides = [1, 1]} : vector<8x160xf32> to vector<8x128xf32>
    %164 = arith.negf %163 : vector<8x128xf32>
    %165 = math.exp %164 : vector<8x128xf32>
    %cst_40 = arith.constant 1.000000e+00 : f32
    %166 = vector.broadcast %cst_40 : f32 to vector<8x128xf32>
    %167 = arith.addf %166, %165 : vector<8x128xf32>
    %168 = arith.divf %166, %167 : vector<8x128xf32>
    %169 = vector.extract_strided_slice %162 {offsets = [0, 128], sizes = [8, 32], strides = [1, 1]} : vector<8x160xf32> to vector<8x32xf32>
    %170 = math.tanh %169 : vector<8x32xf32>
    %171 = vector.extract_strided_slice %168 {offsets = [0, 96], sizes = [8, 32], strides = [1, 1]} : vector<8x128xf32> to vector<8x32xf32>
    %172 = vector.extract_strided_slice %168 {offsets = [0, 32], sizes = [8, 32], strides = [1, 1]} : vector<8x128xf32> to vector<8x32xf32>
    %173 = arith.mulf %172, %128 : vector<8x32xf32>
    %174 = vector.extract_strided_slice %168 {offsets = [0, 0], sizes = [8, 32], strides = [1, 1]} : vector<8x128xf32> to vector<8x32xf32>
    %175 = arith.mulf %174, %170 : vector<8x32xf32>
    %176 = arith.addf %173, %175 : vector<8x32xf32>
    %177 = vector.extract_strided_slice %168 {offsets = [0, 64], sizes = [8, 32], strides = [1, 1]} : vector<8x128xf32> to vector<8x32xf32>
    %178 = math.tanh %176 : vector<8x32xf32>
    %179 = arith.mulf %177, %178 : vector<8x32xf32>
    %180 = arith.mulf %171, %179 : vector<8x32xf32>
    %cst_41 = arith.constant 1.000000e+00 : f32
    %181 = vector.broadcast %cst_41 : f32 to vector<8x32xf32>
    %182 = arith.subf %181, %171 : vector<8x32xf32>
    %183 = arith.mulf %182, %123 : vector<8x32xf32>
    %184 = arith.addf %180, %183 : vector<8x32xf32>
    %185 = arith.mulf %171, %176 : vector<8x32xf32>
    %cst_42 = arith.constant 1.000000e+00 : f32
    %186 = vector.broadcast %cst_42 : f32 to vector<8x32xf32>
    %187 = arith.subf %186, %171 : vector<8x32xf32>
    %188 = arith.mulf %187, %128 : vector<8x32xf32>
    %189 = arith.addf %185, %188 : vector<8x32xf32>
    %190 = vector.extract_strided_slice %171 {offsets = [0, 0], sizes = [8, 1], strides = [1, 1]} : vector<8x32xf32> to vector<8x1xf32>
    %c0_43 = arith.constant 0 : index
    %c2_44 = arith.constant 2 : index
    %191 = vector.load %arg7[%c0_43, %c2_44] : memref<8x8xf32, #tpu.memory_space<vmem>>, vector<8x1xf32>
    tpu.vector_store %arg7[%c0_43, %c2_44], %190 {strides = array<i32>} : memref<8x8xf32, #tpu.memory_space<vmem>>, vector<8x1xf32>,
    %cst_45 = arith.constant 1.000000e+00 : f32
    %192 = vector.broadcast %cst_45 : f32 to vector<8x32xf32>
    %193 = arith.subf %192, %171 : vector<8x32xf32>
    %194 = arith.mulf %157, %193 : vector<8x32xf32>
    %195 = arith.mulf %154, %193 : vector<8x32xf32>
    %c3 = arith.constant 3 : index
    %c0_46 = arith.constant 0 : index
    %c0_47 = arith.constant 0 : index
    %196 = vector.load %arg1[%c3, %c0_46, %c0_47] : memref<8x8x32xf32, #tpu.memory_space<vmem>>, vector<1x8x32xf32>
    %197 = vector.shape_cast %196 : vector<1x8x32xf32> to vector<8x32xf32>
    %198 = tpu.concatenate %197, %194 in 1 : vector<8x32xf32>, vector<8x32xf32> -> vector<8x64xf32>
    %199 = arith.truncf %198 : vector<8x64xf32> to vector<8x64xbf16>
    %cst_48 = arith.constant dense<0.000000e+00> : vector<8x128xf32>
    %200 = tpu.matmul %199, %0, %cst_48 {dimension_numbers = #tpu.dot_dimension_numbers<[1], [0], [0], [1], [0, 0, 1, 1], [], []>} : vector<8x64xbf16>, vector<64x128xbf16>, vector<8x128xf32> -> vector<8x128xf32>
    %201 = vector.broadcast %1 : vector<1x128xf32> to vector<8x128xf32>
    %202 = arith.addf %200, %201 : vector<8x128xf32>
    %203 = vector.extract_strided_slice %202 {offsets = [0, 0], sizes = [8, 96], strides = [1, 1]} : vector<8x128xf32> to vector<8x96xf32>
    %204 = arith.negf %203 : vector<8x96xf32>
    %205 = math.exp %204 : vector<8x96xf32>
    %cst_49 = arith.constant 1.000000e+00 : f32
    %206 = vector.broadcast %cst_49 : f32 to vector<8x96xf32>
    %207 = arith.addf %206, %205 : vector<8x96xf32>
    %208 = arith.divf %206, %207 : vector<8x96xf32>
    %209 = vector.extract_strided_slice %202 {offsets = [0, 96], sizes = [8, 32], strides = [1, 1]} : vector<8x128xf32> to vector<8x32xf32>
    %210 = math.tanh %209 : vector<8x32xf32>
    %211 = vector.extract_strided_slice %208 {offsets = [0, 32], sizes = [8, 32], strides = [1, 1]} : vector<8x96xf32> to vector<8x32xf32>
    %212 = arith.mulf %211, %195 : vector<8x32xf32>
    %213 = vector.extract_strided_slice %208 {offsets = [0, 0], sizes = [8, 32], strides = [1, 1]} : vector<8x96xf32> to vector<8x32xf32>
    %214 = arith.mulf %213, %210 : vector<8x32xf32>
    %215 = arith.addf %212, %214 : vector<8x32xf32>
    %216 = vector.extract_strided_slice %208 {offsets = [0, 64], sizes = [8, 32], strides = [1, 1]} : vector<8x96xf32> to vector<8x32xf32>
    %217 = math.tanh %215 : vector<8x32xf32>
    %218 = arith.mulf %216, %217 : vector<8x32xf32>
    %219 = tpu.concatenate %218, %184 in 1 : vector<8x32xf32>, vector<8x32xf32> -> vector<8x64xf32>
    %220 = arith.truncf %219 : vector<8x64xf32> to vector<8x64xbf16>
    %cst_50 = arith.constant dense<0.000000e+00> : vector<8x160xf32>
    %221 = tpu.matmul %220, %2, %cst_50 {dimension_numbers = #tpu.dot_dimension_numbers<[1], [0], [0], [1], [0, 0, 1, 1], [], []>} : vector<8x64xbf16>, vector<64x160xbf16>, vector<8x160xf32> -> vector<8x160xf32>
    %222 = vector.broadcast %3 : vector<1x160xf32> to vector<8x160xf32>
    %223 = arith.addf %221, %222 : vector<8x160xf32>
    %224 = vector.extract_strided_slice %223 {offsets = [0, 0], sizes = [8, 128], strides = [1, 1]} : vector<8x160xf32> to vector<8x128xf32>
    %225 = arith.negf %224 : vector<8x128xf32>
    %226 = math.exp %225 : vector<8x128xf32>
    %cst_51 = arith.constant 1.000000e+00 : f32
    %227 = vector.broadcast %cst_51 : f32 to vector<8x128xf32>
    %228 = arith.addf %227, %226 : vector<8x128xf32>
    %229 = arith.divf %227, %228 : vector<8x128xf32>
    %230 = vector.extract_strided_slice %223 {offsets = [0, 128], sizes = [8, 32], strides = [1, 1]} : vector<8x160xf32> to vector<8x32xf32>
    %231 = math.tanh %230 : vector<8x32xf32>
    %232 = vector.extract_strided_slice %229 {offsets = [0, 96], sizes = [8, 32], strides = [1, 1]} : vector<8x128xf32> to vector<8x32xf32>
    %233 = vector.extract_strided_slice %229 {offsets = [0, 32], sizes = [8, 32], strides = [1, 1]} : vector<8x128xf32> to vector<8x32xf32>
    %234 = arith.mulf %233, %189 : vector<8x32xf32>
    %235 = vector.extract_strided_slice %229 {offsets = [0, 0], sizes = [8, 32], strides = [1, 1]} : vector<8x128xf32> to vector<8x32xf32>
    %236 = arith.mulf %235, %231 : vector<8x32xf32>
    %237 = arith.addf %234, %236 : vector<8x32xf32>
    %238 = vector.extract_strided_slice %229 {offsets = [0, 64], sizes = [8, 32], strides = [1, 1]} : vector<8x128xf32> to vector<8x32xf32>
    %239 = math.tanh %237 : vector<8x32xf32>
    %240 = arith.mulf %238, %239 : vector<8x32xf32>
    %241 = arith.mulf %232, %240 : vector<8x32xf32>
    %cst_52 = arith.constant 1.000000e+00 : f32
    %242 = vector.broadcast %cst_52 : f32 to vector<8x32xf32>
    %243 = arith.subf %242, %232 : vector<8x32xf32>
    %244 = arith.mulf %243, %184 : vector<8x32xf32>
    %245 = arith.addf %241, %244 : vector<8x32xf32>
    %246 = arith.mulf %232, %237 : vector<8x32xf32>
    %cst_53 = arith.constant 1.000000e+00 : f32
    %247 = vector.broadcast %cst_53 : f32 to vector<8x32xf32>
    %248 = arith.subf %247, %232 : vector<8x32xf32>
    %249 = arith.mulf %248, %189 : vector<8x32xf32>
    %250 = arith.addf %246, %249 : vector<8x32xf32>
    %251 = vector.extract_strided_slice %232 {offsets = [0, 0], sizes = [8, 1], strides = [1, 1]} : vector<8x32xf32> to vector<8x1xf32>
    %c0_54 = arith.constant 0 : index
    %c3_55 = arith.constant 3 : index
    %252 = vector.load %arg7[%c0_54, %c3_55] : memref<8x8xf32, #tpu.memory_space<vmem>>, vector<8x1xf32>
    tpu.vector_store %arg7[%c0_54, %c3_55], %251 {strides = array<i32>} : memref<8x8xf32, #tpu.memory_space<vmem>>, vector<8x1xf32>,
    %cst_56 = arith.constant 1.000000e+00 : f32
    %253 = vector.broadcast %cst_56 : f32 to vector<8x32xf32>
    %254 = arith.subf %253, %232 : vector<8x32xf32>
    %255 = arith.mulf %218, %254 : vector<8x32xf32>
    %256 = arith.mulf %215, %254 : vector<8x32xf32>
    %c4 = arith.constant 4 : index
    %c0_57 = arith.constant 0 : index
    %c0_58 = arith.constant 0 : index
    %257 = vector.load %arg1[%c4, %c0_57, %c0_58] : memref<8x8x32xf32, #tpu.memory_space<vmem>>, vector<1x8x32xf32>
    %258 = vector.shape_cast %257 : vector<1x8x32xf32> to vector<8x32xf32>
    %259 = tpu.concatenate %258, %255 in 1 : vector<8x32xf32>, vector<8x32xf32> -> vector<8x64xf32>
    %260 = arith.truncf %259 : vector<8x64xf32> to vector<8x64xbf16>
    %cst_59 = arith.constant dense<0.000000e+00> : vector<8x128xf32>
    %261 = tpu.matmul %260, %0, %cst_59 {dimension_numbers = #tpu.dot_dimension_numbers<[1], [0], [0], [1], [0, 0, 1, 1], [], []>} : vector<8x64xbf16>, vector<64x128xbf16>, vector<8x128xf32> -> vector<8x128xf32>
    %262 = vector.broadcast %1 : vector<1x128xf32> to vector<8x128xf32>
    %263 = arith.addf %261, %262 : vector<8x128xf32>
    %264 = vector.extract_strided_slice %263 {offsets = [0, 0], sizes = [8, 96], strides = [1, 1]} : vector<8x128xf32> to vector<8x96xf32>
    %265 = arith.negf %264 : vector<8x96xf32>
    %266 = math.exp %265 : vector<8x96xf32>
    %cst_60 = arith.constant 1.000000e+00 : f32
    %267 = vector.broadcast %cst_60 : f32 to vector<8x96xf32>
    %268 = arith.addf %267, %266 : vector<8x96xf32>
    %269 = arith.divf %267, %268 : vector<8x96xf32>
    %270 = vector.extract_strided_slice %263 {offsets = [0, 96], sizes = [8, 32], strides = [1, 1]} : vector<8x128xf32> to vector<8x32xf32>
    %271 = math.tanh %270 : vector<8x32xf32>
    %272 = vector.extract_strided_slice %269 {offsets = [0, 32], sizes = [8, 32], strides = [1, 1]} : vector<8x96xf32> to vector<8x32xf32>
    %273 = arith.mulf %272, %256 : vector<8x32xf32>
    %274 = vector.extract_strided_slice %269 {offsets = [0, 0], sizes = [8, 32], strides = [1, 1]} : vector<8x96xf32> to vector<8x32xf32>
    %275 = arith.mulf %274, %271 : vector<8x32xf32>
    %276 = arith.addf %273, %275 : vector<8x32xf32>
    %277 = vector.extract_strided_slice %269 {offsets = [0, 64], sizes = [8, 32], strides = [1, 1]} : vector<8x96xf32> to vector<8x32xf32>
    %278 = math.tanh %276 : vector<8x32xf32>
    %279 = arith.mulf %277, %278 : vector<8x32xf32>
    %280 = tpu.concatenate %279, %245 in 1 : vector<8x32xf32>, vector<8x32xf32> -> vector<8x64xf32>
    %281 = arith.truncf %280 : vector<8x64xf32> to vector<8x64xbf16>
    %cst_61 = arith.constant dense<0.000000e+00> : vector<8x160xf32>
    %282 = tpu.matmul %281, %2, %cst_61 {dimension_numbers = #tpu.dot_dimension_numbers<[1], [0], [0], [1], [0, 0, 1, 1], [], []>} : vector<8x64xbf16>, vector<64x160xbf16>, vector<8x160xf32> -> vector<8x160xf32>
    %283 = vector.broadcast %3 : vector<1x160xf32> to vector<8x160xf32>
    %284 = arith.addf %282, %283 : vector<8x160xf32>
    %285 = vector.extract_strided_slice %284 {offsets = [0, 0], sizes = [8, 128], strides = [1, 1]} : vector<8x160xf32> to vector<8x128xf32>
    %286 = arith.negf %285 : vector<8x128xf32>
    %287 = math.exp %286 : vector<8x128xf32>
    %cst_62 = arith.constant 1.000000e+00 : f32
    %288 = vector.broadcast %cst_62 : f32 to vector<8x128xf32>
    %289 = arith.addf %288, %287 : vector<8x128xf32>
    %290 = arith.divf %288, %289 : vector<8x128xf32>
    %291 = vector.extract_strided_slice %284 {offsets = [0, 128], sizes = [8, 32], strides = [1, 1]} : vector<8x160xf32> to vector<8x32xf32>
    %292 = math.tanh %291 : vector<8x32xf32>
    %293 = vector.extract_strided_slice %290 {offsets = [0, 96], sizes = [8, 32], strides = [1, 1]} : vector<8x128xf32> to vector<8x32xf32>
    %294 = vector.extract_strided_slice %290 {offsets = [0, 32], sizes = [8, 32], strides = [1, 1]} : vector<8x128xf32> to vector<8x32xf32>
    %295 = arith.mulf %294, %250 : vector<8x32xf32>
    %296 = vector.extract_strided_slice %290 {offsets = [0, 0], sizes = [8, 32], strides = [1, 1]} : vector<8x128xf32> to vector<8x32xf32>
    %297 = arith.mulf %296, %292 : vector<8x32xf32>
    %298 = arith.addf %295, %297 : vector<8x32xf32>
    %299 = vector.extract_strided_slice %290 {offsets = [0, 64], sizes = [8, 32], strides = [1, 1]} : vector<8x128xf32> to vector<8x32xf32>
    %300 = math.tanh %298 : vector<8x32xf32>
    %301 = arith.mulf %299, %300 : vector<8x32xf32>
    %302 = arith.mulf %293, %301 : vector<8x32xf32>
    %cst_63 = arith.constant 1.000000e+00 : f32
    %303 = vector.broadcast %cst_63 : f32 to vector<8x32xf32>
    %304 = arith.subf %303, %293 : vector<8x32xf32>
    %305 = arith.mulf %304, %245 : vector<8x32xf32>
    %306 = arith.addf %302, %305 : vector<8x32xf32>
    %307 = arith.mulf %293, %298 : vector<8x32xf32>
    %cst_64 = arith.constant 1.000000e+00 : f32
    %308 = vector.broadcast %cst_64 : f32 to vector<8x32xf32>
    %309 = arith.subf %308, %293 : vector<8x32xf32>
    %310 = arith.mulf %309, %250 : vector<8x32xf32>
    %311 = arith.addf %307, %310 : vector<8x32xf32>
    %312 = vector.extract_strided_slice %293 {offsets = [0, 0], sizes = [8, 1], strides = [1, 1]} : vector<8x32xf32> to vector<8x1xf32>
    %c0_65 = arith.constant 0 : index
    %c4_66 = arith.constant 4 : index
    %313 = vector.load %arg7[%c0_65, %c4_66] : memref<8x8xf32, #tpu.memory_space<vmem>>, vector<8x1xf32>
    tpu.vector_store %arg7[%c0_65, %c4_66], %312 {strides = array<i32>} : memref<8x8xf32, #tpu.memory_space<vmem>>, vector<8x1xf32>,
    %cst_67 = arith.constant 1.000000e+00 : f32
    %314 = vector.broadcast %cst_67 : f32 to vector<8x32xf32>
    %315 = arith.subf %314, %293 : vector<8x32xf32>
    %316 = arith.mulf %279, %315 : vector<8x32xf32>
    %317 = arith.mulf %276, %315 : vector<8x32xf32>
    %c5 = arith.constant 5 : index
    %c0_68 = arith.constant 0 : index
    %c0_69 = arith.constant 0 : index
    %318 = vector.load %arg1[%c5, %c0_68, %c0_69] : memref<8x8x32xf32, #tpu.memory_space<vmem>>, vector<1x8x32xf32>
    %319 = vector.shape_cast %318 : vector<1x8x32xf32> to vector<8x32xf32>
    %320 = tpu.concatenate %319, %316 in 1 : vector<8x32xf32>, vector<8x32xf32> -> vector<8x64xf32>
    %321 = arith.truncf %320 : vector<8x64xf32> to vector<8x64xbf16>
    %cst_70 = arith.constant dense<0.000000e+00> : vector<8x128xf32>
    %322 = tpu.matmul %321, %0, %cst_70 {dimension_numbers = #tpu.dot_dimension_numbers<[1], [0], [0], [1], [0, 0, 1, 1], [], []>} : vector<8x64xbf16>, vector<64x128xbf16>, vector<8x128xf32> -> vector<8x128xf32>
    %323 = vector.broadcast %1 : vector<1x128xf32> to vector<8x128xf32>
    %324 = arith.addf %322, %323 : vector<8x128xf32>
    %325 = vector.extract_strided_slice %324 {offsets = [0, 0], sizes = [8, 96], strides = [1, 1]} : vector<8x128xf32> to vector<8x96xf32>
    %326 = arith.negf %325 : vector<8x96xf32>
    %327 = math.exp %326 : vector<8x96xf32>
    %cst_71 = arith.constant 1.000000e+00 : f32
    %328 = vector.broadcast %cst_71 : f32 to vector<8x96xf32>
    %329 = arith.addf %328, %327 : vector<8x96xf32>
    %330 = arith.divf %328, %329 : vector<8x96xf32>
    %331 = vector.extract_strided_slice %324 {offsets = [0, 96], sizes = [8, 32], strides = [1, 1]} : vector<8x128xf32> to vector<8x32xf32>
    %332 = math.tanh %331 : vector<8x32xf32>
    %333 = vector.extract_strided_slice %330 {offsets = [0, 32], sizes = [8, 32], strides = [1, 1]} : vector<8x96xf32> to vector<8x32xf32>
    %334 = arith.mulf %333, %317 : vector<8x32xf32>
    %335 = vector.extract_strided_slice %330 {offsets = [0, 0], sizes = [8, 32], strides = [1, 1]} : vector<8x96xf32> to vector<8x32xf32>
    %336 = arith.mulf %335, %332 : vector<8x32xf32>
    %337 = arith.addf %334, %336 : vector<8x32xf32>
    %338 = vector.extract_strided_slice %330 {offsets = [0, 64], sizes = [8, 32], strides = [1, 1]} : vector<8x96xf32> to vector<8x32xf32>
    %339 = math.tanh %337 : vector<8x32xf32>
    %340 = arith.mulf %338, %339 : vector<8x32xf32>
    %341 = tpu.concatenate %340, %306 in 1 : vector<8x32xf32>, vector<8x32xf32> -> vector<8x64xf32>
    %342 = arith.truncf %341 : vector<8x64xf32> to vector<8x64xbf16>
    %cst_72 = arith.constant dense<0.000000e+00> : vector<8x160xf32>
    %343 = tpu.matmul %342, %2, %cst_72 {dimension_numbers = #tpu.dot_dimension_numbers<[1], [0], [0], [1], [0, 0, 1, 1], [], []>} : vector<8x64xbf16>, vector<64x160xbf16>, vector<8x160xf32> -> vector<8x160xf32>
    %344 = vector.broadcast %3 : vector<1x160xf32> to vector<8x160xf32>
    %345 = arith.addf %343, %344 : vector<8x160xf32>
    %346 = vector.extract_strided_slice %345 {offsets = [0, 0], sizes = [8, 128], strides = [1, 1]} : vector<8x160xf32> to vector<8x128xf32>
    %347 = arith.negf %346 : vector<8x128xf32>
    %348 = math.exp %347 : vector<8x128xf32>
    %cst_73 = arith.constant 1.000000e+00 : f32
    %349 = vector.broadcast %cst_73 : f32 to vector<8x128xf32>
    %350 = arith.addf %349, %348 : vector<8x128xf32>
    %351 = arith.divf %349, %350 : vector<8x128xf32>
    %352 = vector.extract_strided_slice %345 {offsets = [0, 128], sizes = [8, 32], strides = [1, 1]} : vector<8x160xf32> to vector<8x32xf32>
    %353 = math.tanh %352 : vector<8x32xf32>
    %354 = vector.extract_strided_slice %351 {offsets = [0, 96], sizes = [8, 32], strides = [1, 1]} : vector<8x128xf32> to vector<8x32xf32>
    %355 = vector.extract_strided_slice %351 {offsets = [0, 32], sizes = [8, 32], strides = [1, 1]} : vector<8x128xf32> to vector<8x32xf32>
    %356 = arith.mulf %355, %311 : vector<8x32xf32>
    %357 = vector.extract_strided_slice %351 {offsets = [0, 0], sizes = [8, 32], strides = [1, 1]} : vector<8x128xf32> to vector<8x32xf32>
    %358 = arith.mulf %357, %353 : vector<8x32xf32>
    %359 = arith.addf %356, %358 : vector<8x32xf32>
    %360 = vector.extract_strided_slice %351 {offsets = [0, 64], sizes = [8, 32], strides = [1, 1]} : vector<8x128xf32> to vector<8x32xf32>
    %361 = math.tanh %359 : vector<8x32xf32>
    %362 = arith.mulf %360, %361 : vector<8x32xf32>
    %363 = arith.mulf %354, %362 : vector<8x32xf32>
    %cst_74 = arith.constant 1.000000e+00 : f32
    %364 = vector.broadcast %cst_74 : f32 to vector<8x32xf32>
    %365 = arith.subf %364, %354 : vector<8x32xf32>
    %366 = arith.mulf %365, %306 : vector<8x32xf32>
    %367 = arith.addf %363, %366 : vector<8x32xf32>
    %368 = arith.mulf %354, %359 : vector<8x32xf32>
    %cst_75 = arith.constant 1.000000e+00 : f32
    %369 = vector.broadcast %cst_75 : f32 to vector<8x32xf32>
    %370 = arith.subf %369, %354 : vector<8x32xf32>
    %371 = arith.mulf %370, %311 : vector<8x32xf32>
    %372 = arith.addf %368, %371 : vector<8x32xf32>
    %373 = vector.extract_strided_slice %354 {offsets = [0, 0], sizes = [8, 1], strides = [1, 1]} : vector<8x32xf32> to vector<8x1xf32>
    %c0_76 = arith.constant 0 : index
    %c5_77 = arith.constant 5 : index
    %374 = vector.load %arg7[%c0_76, %c5_77] : memref<8x8xf32, #tpu.memory_space<vmem>>, vector<8x1xf32>
    tpu.vector_store %arg7[%c0_76, %c5_77], %373 {strides = array<i32>} : memref<8x8xf32, #tpu.memory_space<vmem>>, vector<8x1xf32>,
    %cst_78 = arith.constant 1.000000e+00 : f32
    %375 = vector.broadcast %cst_78 : f32 to vector<8x32xf32>
    %376 = arith.subf %375, %354 : vector<8x32xf32>
    %377 = arith.mulf %340, %376 : vector<8x32xf32>
    %378 = arith.mulf %337, %376 : vector<8x32xf32>
    %c6 = arith.constant 6 : index
    %c0_79 = arith.constant 0 : index
    %c0_80 = arith.constant 0 : index
    %379 = vector.load %arg1[%c6, %c0_79, %c0_80] : memref<8x8x32xf32, #tpu.memory_space<vmem>>, vector<1x8x32xf32>
    %380 = vector.shape_cast %379 : vector<1x8x32xf32> to vector<8x32xf32>
    %381 = tpu.concatenate %380, %377 in 1 : vector<8x32xf32>, vector<8x32xf32> -> vector<8x64xf32>
    %382 = arith.truncf %381 : vector<8x64xf32> to vector<8x64xbf16>
    %cst_81 = arith.constant dense<0.000000e+00> : vector<8x128xf32>
    %383 = tpu.matmul %382, %0, %cst_81 {dimension_numbers = #tpu.dot_dimension_numbers<[1], [0], [0], [1], [0, 0, 1, 1], [], []>} : vector<8x64xbf16>, vector<64x128xbf16>, vector<8x128xf32> -> vector<8x128xf32>
    %384 = vector.broadcast %1 : vector<1x128xf32> to vector<8x128xf32>
    %385 = arith.addf %383, %384 : vector<8x128xf32>
    %386 = vector.extract_strided_slice %385 {offsets = [0, 0], sizes = [8, 96], strides = [1, 1]} : vector<8x128xf32> to vector<8x96xf32>
    %387 = arith.negf %386 : vector<8x96xf32>
    %388 = math.exp %387 : vector<8x96xf32>
    %cst_82 = arith.constant 1.000000e+00 : f32
    %389 = vector.broadcast %cst_82 : f32 to vector<8x96xf32>
    %390 = arith.addf %389, %388 : vector<8x96xf32>
    %391 = arith.divf %389, %390 : vector<8x96xf32>
    %392 = vector.extract_strided_slice %385 {offsets = [0, 96], sizes = [8, 32], strides = [1, 1]} : vector<8x128xf32> to vector<8x32xf32>
    %393 = math.tanh %392 : vector<8x32xf32>
    %394 = vector.extract_strided_slice %391 {offsets = [0, 32], sizes = [8, 32], strides = [1, 1]} : vector<8x96xf32> to vector<8x32xf32>
    %395 = arith.mulf %394, %378 : vector<8x32xf32>
    %396 = vector.extract_strided_slice %391 {offsets = [0, 0], sizes = [8, 32], strides = [1, 1]} : vector<8x96xf32> to vector<8x32xf32>
    %397 = arith.mulf %396, %393 : vector<8x32xf32>
    %398 = arith.addf %395, %397 : vector<8x32xf32>
    %399 = vector.extract_strided_slice %391 {offsets = [0, 64], sizes = [8, 32], strides = [1, 1]} : vector<8x96xf32> to vector<8x32xf32>
    %400 = math.tanh %398 : vector<8x32xf32>
    %401 = arith.mulf %399, %400 : vector<8x32xf32>
    %402 = tpu.concatenate %401, %367 in 1 : vector<8x32xf32>, vector<8x32xf32> -> vector<8x64xf32>
    %403 = arith.truncf %402 : vector<8x64xf32> to vector<8x64xbf16>
    %cst_83 = arith.constant dense<0.000000e+00> : vector<8x160xf32>
    %404 = tpu.matmul %403, %2, %cst_83 {dimension_numbers = #tpu.dot_dimension_numbers<[1], [0], [0], [1], [0, 0, 1, 1], [], []>} : vector<8x64xbf16>, vector<64x160xbf16>, vector<8x160xf32> -> vector<8x160xf32>
    %405 = vector.broadcast %3 : vector<1x160xf32> to vector<8x160xf32>
    %406 = arith.addf %404, %405 : vector<8x160xf32>
    %407 = vector.extract_strided_slice %406 {offsets = [0, 0], sizes = [8, 128], strides = [1, 1]} : vector<8x160xf32> to vector<8x128xf32>
    %408 = arith.negf %407 : vector<8x128xf32>
    %409 = math.exp %408 : vector<8x128xf32>
    %cst_84 = arith.constant 1.000000e+00 : f32
    %410 = vector.broadcast %cst_84 : f32 to vector<8x128xf32>
    %411 = arith.addf %410, %409 : vector<8x128xf32>
    %412 = arith.divf %410, %411 : vector<8x128xf32>
    %413 = vector.extract_strided_slice %406 {offsets = [0, 128], sizes = [8, 32], strides = [1, 1]} : vector<8x160xf32> to vector<8x32xf32>
    %414 = math.tanh %413 : vector<8x32xf32>
    %415 = vector.extract_strided_slice %412 {offsets = [0, 96], sizes = [8, 32], strides = [1, 1]} : vector<8x128xf32> to vector<8x32xf32>
    %416 = vector.extract_strided_slice %412 {offsets = [0, 32], sizes = [8, 32], strides = [1, 1]} : vector<8x128xf32> to vector<8x32xf32>
    %417 = arith.mulf %416, %372 : vector<8x32xf32>
    %418 = vector.extract_strided_slice %412 {offsets = [0, 0], sizes = [8, 32], strides = [1, 1]} : vector<8x128xf32> to vector<8x32xf32>
    %419 = arith.mulf %418, %414 : vector<8x32xf32>
    %420 = arith.addf %417, %419 : vector<8x32xf32>
    %421 = vector.extract_strided_slice %412 {offsets = [0, 64], sizes = [8, 32], strides = [1, 1]} : vector<8x128xf32> to vector<8x32xf32>
    %422 = math.tanh %420 : vector<8x32xf32>
    %423 = arith.mulf %421, %422 : vector<8x32xf32>
    %424 = arith.mulf %415, %423 : vector<8x32xf32>
    %cst_85 = arith.constant 1.000000e+00 : f32
    %425 = vector.broadcast %cst_85 : f32 to vector<8x32xf32>
    %426 = arith.subf %425, %415 : vector<8x32xf32>
    %427 = arith.mulf %426, %367 : vector<8x32xf32>
    %428 = arith.addf %424, %427 : vector<8x32xf32>
    %429 = arith.mulf %415, %420 : vector<8x32xf32>
    %cst_86 = arith.constant 1.000000e+00 : f32
    %430 = vector.broadcast %cst_86 : f32 to vector<8x32xf32>
    %431 = arith.subf %430, %415 : vector<8x32xf32>
    %432 = arith.mulf %431, %372 : vector<8x32xf32>
    %433 = arith.addf %429, %432 : vector<8x32xf32>
    %434 = vector.extract_strided_slice %415 {offsets = [0, 0], sizes = [8, 1], strides = [1, 1]} : vector<8x32xf32> to vector<8x1xf32>
    %c0_87 = arith.constant 0 : index
    %c6_88 = arith.constant 6 : index
    %435 = vector.load %arg7[%c0_87, %c6_88] : memref<8x8xf32, #tpu.memory_space<vmem>>, vector<8x1xf32>
    tpu.vector_store %arg7[%c0_87, %c6_88], %434 {strides = array<i32>} : memref<8x8xf32, #tpu.memory_space<vmem>>, vector<8x1xf32>,
    %cst_89 = arith.constant 1.000000e+00 : f32
    %436 = vector.broadcast %cst_89 : f32 to vector<8x32xf32>
    %437 = arith.subf %436, %415 : vector<8x32xf32>
    %438 = arith.mulf %401, %437 : vector<8x32xf32>
    %439 = arith.mulf %398, %437 : vector<8x32xf32>
    %c7 = arith.constant 7 : index
    %c0_90 = arith.constant 0 : index
    %c0_91 = arith.constant 0 : index
    %440 = vector.load %arg1[%c7, %c0_90, %c0_91] : memref<8x8x32xf32, #tpu.memory_space<vmem>>, vector<1x8x32xf32>
    %441 = vector.shape_cast %440 : vector<1x8x32xf32> to vector<8x32xf32>
    %442 = tpu.concatenate %441, %438 in 1 : vector<8x32xf32>, vector<8x32xf32> -> vector<8x64xf32>
    %443 = arith.truncf %442 : vector<8x64xf32> to vector<8x64xbf16>
    %cst_92 = arith.constant dense<0.000000e+00> : vector<8x128xf32>
    %444 = tpu.matmul %443, %0, %cst_92 {dimension_numbers = #tpu.dot_dimension_numbers<[1], [0], [0], [1], [0, 0, 1, 1], [], []>} : vector<8x64xbf16>, vector<64x128xbf16>, vector<8x128xf32> -> vector<8x128xf32>
    %445 = vector.broadcast %1 : vector<1x128xf32> to vector<8x128xf32>
    %446 = arith.addf %444, %445 : vector<8x128xf32>
    %447 = vector.extract_strided_slice %446 {offsets = [0, 0], sizes = [8, 96], strides = [1, 1]} : vector<8x128xf32> to vector<8x96xf32>
    %448 = arith.negf %447 : vector<8x96xf32>
    %449 = math.exp %448 : vector<8x96xf32>
    %cst_93 = arith.constant 1.000000e+00 : f32
    %450 = vector.broadcast %cst_93 : f32 to vector<8x96xf32>
    %451 = arith.addf %450, %449 : vector<8x96xf32>
    %452 = arith.divf %450, %451 : vector<8x96xf32>
    %453 = vector.extract_strided_slice %446 {offsets = [0, 96], sizes = [8, 32], strides = [1, 1]} : vector<8x128xf32> to vector<8x32xf32>
    %454 = math.tanh %453 : vector<8x32xf32>
    %455 = vector.extract_strided_slice %452 {offsets = [0, 32], sizes = [8, 32], strides = [1, 1]} : vector<8x96xf32> to vector<8x32xf32>
    %456 = arith.mulf %455, %439 : vector<8x32xf32>
    %457 = vector.extract_strided_slice %452 {offsets = [0, 0], sizes = [8, 32], strides = [1, 1]} : vector<8x96xf32> to vector<8x32xf32>
    %458 = arith.mulf %457, %454 : vector<8x32xf32>
    %459 = arith.addf %456, %458 : vector<8x32xf32>
    %460 = vector.extract_strided_slice %452 {offsets = [0, 64], sizes = [8, 32], strides = [1, 1]} : vector<8x96xf32> to vector<8x32xf32>
    %461 = math.tanh %459 : vector<8x32xf32>
    %462 = arith.mulf %460, %461 : vector<8x32xf32>
    %463 = tpu.concatenate %462, %428 in 1 : vector<8x32xf32>, vector<8x32xf32> -> vector<8x64xf32>
    %464 = arith.truncf %463 : vector<8x64xf32> to vector<8x64xbf16>
    %cst_94 = arith.constant dense<0.000000e+00> : vector<8x160xf32>
    %465 = tpu.matmul %464, %2, %cst_94 {dimension_numbers = #tpu.dot_dimension_numbers<[1], [0], [0], [1], [0, 0, 1, 1], [], []>} : vector<8x64xbf16>, vector<64x160xbf16>, vector<8x160xf32> -> vector<8x160xf32>
    %466 = vector.broadcast %3 : vector<1x160xf32> to vector<8x160xf32>
    %467 = arith.addf %465, %466 : vector<8x160xf32>
    %468 = vector.extract_strided_slice %467 {offsets = [0, 0], sizes = [8, 128], strides = [1, 1]} : vector<8x160xf32> to vector<8x128xf32>
    %469 = arith.negf %468 : vector<8x128xf32>
    %470 = math.exp %469 : vector<8x128xf32>
    %cst_95 = arith.constant 1.000000e+00 : f32
    %471 = vector.broadcast %cst_95 : f32 to vector<8x128xf32>
    %472 = arith.addf %471, %470 : vector<8x128xf32>
    %473 = arith.divf %471, %472 : vector<8x128xf32>
    %474 = vector.extract_strided_slice %467 {offsets = [0, 128], sizes = [8, 32], strides = [1, 1]} : vector<8x160xf32> to vector<8x32xf32>
    %475 = math.tanh %474 : vector<8x32xf32>
    %476 = vector.extract_strided_slice %473 {offsets = [0, 96], sizes = [8, 32], strides = [1, 1]} : vector<8x128xf32> to vector<8x32xf32>
    %477 = vector.extract_strided_slice %473 {offsets = [0, 32], sizes = [8, 32], strides = [1, 1]} : vector<8x128xf32> to vector<8x32xf32>
    %478 = arith.mulf %477, %433 : vector<8x32xf32>
    %479 = vector.extract_strided_slice %473 {offsets = [0, 0], sizes = [8, 32], strides = [1, 1]} : vector<8x128xf32> to vector<8x32xf32>
    %480 = arith.mulf %479, %475 : vector<8x32xf32>
    %481 = arith.addf %478, %480 : vector<8x32xf32>
    %482 = vector.extract_strided_slice %473 {offsets = [0, 64], sizes = [8, 32], strides = [1, 1]} : vector<8x128xf32> to vector<8x32xf32>
    %483 = math.tanh %481 : vector<8x32xf32>
    %484 = arith.mulf %482, %483 : vector<8x32xf32>
    %485 = arith.mulf %476, %484 : vector<8x32xf32>
    %cst_96 = arith.constant 1.000000e+00 : f32
    %486 = vector.broadcast %cst_96 : f32 to vector<8x32xf32>
    %487 = arith.subf %486, %476 : vector<8x32xf32>
    %488 = arith.mulf %487, %428 : vector<8x32xf32>
    %489 = arith.addf %485, %488 : vector<8x32xf32>
    %490 = vector.extract_strided_slice %476 {offsets = [0, 0], sizes = [8, 1], strides = [1, 1]} : vector<8x32xf32> to vector<8x1xf32>
    %c0_97 = arith.constant 0 : index
    %c7_98 = arith.constant 7 : index
    %491 = vector.load %arg7[%c0_97, %c7_98] : memref<8x8xf32, #tpu.memory_space<vmem>>, vector<8x1xf32>
    tpu.vector_store %arg7[%c0_97, %c7_98], %490 {strides = array<i32>} : memref<8x8xf32, #tpu.memory_space<vmem>>, vector<8x1xf32>,
    %c0_99 = arith.constant 0 : index
    %c0_100 = arith.constant 0 : index
    %492 = vector.load %arg6[%c0_99, %c0_100] : memref<8x32xf32, #tpu.memory_space<vmem>>, vector<8x32xf32>
    tpu.vector_store %arg6[%c0_99, %c0_100], %489 {strides = array<i32>} : memref<8x32xf32, #tpu.memory_space<vmem>>, vector<8x32xf32>,
    return
  }
  func.func @transform_0(%arg0: i32) -> (i32, i32, i32) {
    %c0_i32 = arith.constant 0 : i32
    %c0_i32_0 = arith.constant 0 : i32
    %c0_i32_1 = arith.constant 0 : i32
    return %c0_i32, %arg0, %c0_i32_0 : i32, i32, i32
  }
  func.func @transform_1(%arg0: i32) -> (i32, i32) {
    %c0_i32 = arith.constant 0 : i32
    %c0_i32_0 = arith.constant 0 : i32
    %c0_i32_1 = arith.constant 0 : i32
    return %c0_i32, %c0_i32_0 : i32, i32
  }
  func.func @transform_2(%arg0: i32) -> (i32, i32) {
    %c0_i32 = arith.constant 0 : i32
    %c0_i32_0 = arith.constant 0 : i32
    %c0_i32_1 = arith.constant 0 : i32
    return %c0_i32, %c0_i32_0 : i32, i32
  }
  func.func @transform_3(%arg0: i32) -> (i32, i32) {
    %c0_i32 = arith.constant 0 : i32
    %c0_i32_0 = arith.constant 0 : i32
    %c0_i32_1 = arith.constant 0 : i32
    return %c0_i32, %c0_i32_0 : i32, i32
  }
  func.func @transform_4(%arg0: i32) -> (i32, i32) {
    %c0_i32 = arith.constant 0 : i32
    %c0_i32_0 = arith.constant 0 : i32
    %c0_i32_1 = arith.constant 0 : i32
    return %c0_i32, %c0_i32_0 : i32, i32
  }
  func.func @transform_5(%arg0: i32) -> (i32, i32) {
    %c0_i32 = arith.constant 0 : i32
    %c0_i32_0 = arith.constant 0 : i32
    return %arg0, %c0_i32 : i32, i32
  }
  func.func @transform_6(%arg0: i32) -> (i32, i32) {
    %c0_i32 = arith.constant 0 : i32
    %c0_i32_0 = arith.constant 0 : i32
    return %arg0, %c0_i32 : i32, i32
  }
}

</mosaic_0001>

<llo_original>
// kernel: tpu_custom_call.1
$region0: #{tpu_custom_call.1}
  #allocation0 [shape = 'u32[]', space=smem, size = 0x4, offset = 0x4, fixed_abs, tag = 'smem constant byte address 0x4 - core index']
  #allocation1 [shape = 'u32[72,128]{1,0:T(1,128)}', space=vmem, size = 0x9000, scoped, tag = 'internal scratch']
  %s0 = inlined_call_operand.hbm [shape: f32[8,16,32], index: 0, kind: input, shape index: {}]
  %s1 = inlined_call_operand.hbm [shape: bf16[64,128], index: 1, kind: input, shape index: {}]
  %s2 = inlined_call_operand.vmem [shape: f32[1,128], index: 2, kind: input, shape index: {}]
  %s3 = inlined_call_operand.hbm [shape: bf16[64,160], index: 3, kind: input, shape index: {}]
  %s4 = inlined_call_operand.vmem [shape: f32[1,160], index: 4, kind: input, shape index: {}]
  %s5 = inlined_call_operand.hbm [shape: f32[16,32], index: 5, kind: output, shape index: {0}]
  %s6 = inlined_call_operand.vmem [shape: f32[16,8], index: 6, kind: output, shape index: {1}]
  %7 = xla_tuple %s5, %s6
  %s8 = sld [smem:[#allocation0]]
  $region73: #{tpu_custom_call.1} parent=0
    _
  %s10 = ssub.s32 1, %s8
  %s11 = scalar_select 0, %s10, %s8
  $region1: #{tpu_custom_call.1} parent=0
    #allocation2 [shape = 'u8[65536]{0}', space=vmem, size = 0x10000, scoped, tag = 'input window, operand 0']
    #allocation3 [shape = 's32[2]{0}', space=sflag, size = 0x8, scoped, tag = 'scoped memory for tpu_custom_call.1']
    #allocation4 [shape = 's32[2]{0}', space=sflag, size = 0x8, scoped, tag = 'scoped memory for tpu_custom_call.1']
    #allocation5 [shape = 'u8[16384]{0}', space=vmem, size = 0x4000, scoped, tag = 'input window, operand 1, single buffered']
    #allocation6 [shape = 's32[1]{0}', space=sflag, size = 0x4, scoped, tag = 'scoped memory for tpu_custom_call.1']
    #allocation7 [shape = 'u8[32768]{0}', space=vmem, size = 0x8000, scoped, tag = 'input window, operand 3, single buffered']
    #allocation8 [shape = 'u8[8192]{0}', space=vmem, size = 0x2000, scoped, tag = 'output window, operand 0']
    %12 = vsyncpa [#allocation3], 0
    %s13 = scalar_lea.sflag [#allocation3], 1
    %14 = vsyncpa %s13, 0
    %15 = vsyncpa [#allocation6], 0
    %16 = vsyncpa [#allocation4], 0
    %s17 = scalar_lea.sflag [#allocation4], 1
    %18 = vsyncpa %s17, 0
    loop: start=0, step=1, limit=4
    $region2: #{tpu_custom_call.1} parent=1 // loop_pre_header
      _
    $region3: #{tpu_custom_call.1} parent=1 // loop_header
      %s20 = sphi 0, %s24
      %p21 = scmp.ge.s32.totalorder %s20, 4
      %s30 = sphi 0, %s32
      %s33 = sphi 0, %s30
      %s34 = sphi 0, %s33
      %s50 = sphi 0, %s34
      %s54 = sphi 0, %s54
      %s56 = sphi 0, %s54
      %s57 = sphi 0, %s56
      %s71 = sphi 0, %s57
      %s75 = sphi 0, %s75
      %s77 = sphi 0, %s75
      %s78 = sphi 0, %s77
      %s92 = sphi 0, %s78
      %s96 = sphi 0, %s96
      %s98 = sphi 0, %s96
      %s99 = sphi 0, %s98
      %s113 = sphi 0, %s99
      %s117 = sphi 0, %s117
      %s119 = sphi 0, %s117
      %s120 = sphi 0, %s119
      %s134 = sphi 0, %s120
      %s140 = sphi 0, %s142
      %s143 = sphi 0, %s140
      %s144 = sphi 0, %s143
      %s160 = sphi 0, %s144
      %s166 = sphi 0, %s168
      %s169 = sphi 0, %s166
      %s170 = sphi 0, %s169
      %s186 = sphi 0, %s170
    $region4: #{tpu_custom_call.1} parent=1 // loop_header_branch
      %23 = sbr.rel (%p21) target = $region8
    $region5: #{tpu_custom_call.1} parent=1 // loop_body
      %s25 = ssub.s32 %s20, 1
      %s26 = ssub.s32 %s20, 2
      %s27 = sadd.s32 %s20, 1
      %s28 = ssub.s32 %s20, %s27
      %p29 = scmp.eq.s32.totalorder %s28, 0
      %s31 = sadd.s32 %s30, 1
      %s32 = scalar_select %p29, %s30, %s31
      %p35 = pneg %p29
      %p36 = scmp.eq.s32.totalorder %s20, 1
      %p37 = por %p35, %p36
      %p38 = scmp.ne.s32.totalorder %s30, %s33
      %p39 = scmp.eq.s32.totalorder %s20, 0
      %p40 = por %p38, %p39
      %p41 = scmp.ne.s32.totalorder %s30, %s33
      %p42 = scmp.eq.s32.totalorder %s25, 1
      %p43 = por %p41, %p42
      %p44 = scmp.ne.s32.totalorder %s33, %s34
      %p45 = scmp.eq.s32.totalorder %s25, 0
      %p46 = por %p44, %p45
      %p47 = scmp.ne.s32.totalorder %s33, %s34
      %p48 = scmp.eq.s32.totalorder %s26, 1
      %p49 = por %p47, %p48
      %p51 = scmp.ne.s32.totalorder %s34, %s50
      %p52 = scmp.eq.s32.totalorder %s26, 0
      %p53 = por %p51, %p52
      %s55 = sadd.s32 %s54, 1
      %p58 = scmp.eq.s32.totalorder %s20, 1
      %p59 = scmp.ne.s32.totalorder %s54, %s56
      %p60 = scmp.eq.s32.totalorder %s20, 0
      %p61 = por %p59, %p60
      %p62 = scmp.ne.s32.totalorder %s54, %s56
      %p63 = scmp.eq.s32.totalorder %s25, 1
      %p64 = por %p62, %p63
      %p65 = scmp.ne.s32.totalorder %s56, %s57
      %p66 = scmp.eq.s32.totalorder %s25, 0
      %p67 = por %p65, %p66
      %p68 = scmp.ne.s32.totalorder %s56, %s57
      %p69 = scmp.eq.s32.totalorder %s26, 1
      %p70 = por %p68, %p69
      %p72 = scmp.ne.s32.totalorder %s57, %s71
      %p73 = scmp.eq.s32.totalorder %s26, 0
      %p74 = por %p72, %p73
      %s76 = sadd.s32 %s75, 1
      %p79 = scmp.eq.s32.totalorder %s20, 1
      %p80 = scmp.ne.s32.totalorder %s75, %s77
      %p81 = scmp.eq.s32.totalorder %s20, 0
      %p82 = por %p80, %p81
      %p83 = scmp.ne.s32.totalorder %s75, %s77
      %p84 = scmp.eq.s32.totalorder %s25, 1
      %p85 = por %p83, %p84
      %p86 = scmp.ne.s32.totalorder %s77, %s78
      %p87 = scmp.eq.s32.totalorder %s25, 0
      %p88 = por %p86, %p87
      %p89 = scmp.ne.s32.totalorder %s77, %s78
      %p90 = scmp.eq.s32.totalorder %s26, 1
      %p91 = por %p89, %p90
      %p93 = scmp.ne.s32.totalorder %s78, %s92
      %p94 = scmp.eq.s32.totalorder %s26, 0
      %p95 = por %p93, %p94
      %s97 = sadd.s32 %s96, 1
      %p100 = scmp.eq.s32.totalorder %s20, 1
      %p101 = scmp.ne.s32.totalorder %s96, %s98
      %p102 = scmp.eq.s32.totalorder %s20, 0
      %p103 = por %p101, %p102
      %p104 = scmp.ne.s32.totalorder %s96, %s98
      %p105 = scmp.eq.s32.totalorder %s25, 1
      %p106 = por %p104, %p105
      %p107 = scmp.ne.s32.totalorder %s98, %s99
      %p108 = scmp.eq.s32.totalorder %s25, 0
      %p109 = por %p107, %p108
      %p110 = scmp.ne.s32.totalorder %s98, %s99
      %p111 = scmp.eq.s32.totalorder %s26, 1
      %p112 = por %p110, %p111
      %p114 = scmp.ne.s32.totalorder %s99, %s113
      %p115 = scmp.eq.s32.totalorder %s26, 0
      %p116 = por %p114, %p115
      %s118 = sadd.s32 %s117, 1
      %p121 = scmp.eq.s32.totalorder %s20, 1
      %p122 = scmp.ne.s32.totalorder %s117, %s119
      %p123 = scmp.eq.s32.totalorder %s20, 0
      %p124 = por %p122, %p123
      %p125 = scmp.ne.s32.totalorder %s117, %s119
      %p126 = scmp.eq.s32.totalorder %s25, 1
      %p127 = por %p125, %p126
      %p128 = scmp.ne.s32.totalorder %s119, %s120
      %p129 = scmp.eq.s32.totalorder %s25, 0
      %p130 = por %p128, %p129
      %p131 = scmp.ne.s32.totalorder %s119, %s120
      %p132 = scmp.eq.s32.totalorder %s26, 1
      %p133 = por %p131, %p132
      %p135 = scmp.ne.s32.totalorder %s120, %s134
      %p136 = scmp.eq.s32.totalorder %s26, 0
      %p137 = por %p135, %p136
      %s138 = ssub.s32 %s20, %s27
      %p139 = scmp.eq.s32.totalorder %s138, 0
      %s141 = sadd.s32 %s140, 1
      %s142 = scalar_select %p139, %s140, %s141
      %p145 = pneg %p139
      %p146 = scmp.eq.s32.totalorder %s20, 1
      %p147 = por %p145, %p146
      %p148 = scmp.ne.s32.totalorder %s140, %s143
      %p149 = scmp.eq.s32.totalorder %s20, 0
      %p150 = por %p148, %p149
      %p151 = scmp.ne.s32.totalorder %s140, %s143
      %p152 = scmp.eq.s32.totalorder %s25, 1
      %p153 = por %p151, %p152
      %p154 = scmp.ne.s32.totalorder %s143, %s144
      %p155 = scmp.eq.s32.totalorder %s25, 0
      %p156 = por %p154, %p155
      %p157 = scmp.ne.s32.totalorder %s143, %s144
      %p158 = scmp.eq.s32.totalorder %s26, 1
      %p159 = por %p157, %p158
      %p161 = scmp.ne.s32.totalorder %s144, %s160
      %p162 = scmp.eq.s32.totalorder %s26, 0
      %p163 = por %p161, %p162
      %s164 = ssub.s32 %s20, %s27
      %p165 = scmp.eq.s32.totalorder %s164, 0
      %s167 = sadd.s32 %s166, 1
      %s168 = scalar_select %p165, %s166, %s167
      %p171 = pneg %p165
      %p172 = scmp.eq.s32.totalorder %s20, 1
      %p173 = por %p171, %p172
      %p174 = scmp.ne.s32.totalorder %s166, %s169
      %p175 = scmp.eq.s32.totalorder %s20, 0
      %p176 = por %p174, %p175
      %p177 = scmp.ne.s32.totalorder %s166, %s169
      %p178 = scmp.eq.s32.totalorder %s25, 1
      %p179 = por %p177, %p178
      %p180 = scmp.ne.s32.totalorder %s169, %s170
      %p181 = scmp.eq.s32.totalorder %s25, 0
      %p182 = por %p180, %p181
      %p183 = scmp.ne.s32.totalorder %s169, %s170
      %p184 = scmp.eq.s32.totalorder %s26, 1
      %p185 = por %p183, %p184
      %p187 = scmp.ne.s32.totalorder %s170, %s186
      %p188 = scmp.eq.s32.totalorder %s26, 0
      %p189 = por %p187, %p188
      %p190 = scmp.le.s32.totalorder 1, %s20
      %p191 = scmp.lt.s32.totalorder %s20, 3
      %p192 = pnand %p190, %p191
      %p193 = pneg %p192
      // Predicated region
      $region9: #{tpu_custom_call.1} parent=5 // pred_check
        _
      $region10: #{tpu_custom_call.1} parent=5 // pred_check_branch
        %195 = sbr.rel (%p192) target = $region12
      $region11: #{tpu_custom_call.1} parent=5 // pred_region
        %s196 = ssub.s32 %s20, 1
        // Predicated region
        $region13: #{tpu_custom_call.1} parent=11 // pred_check
          %p197 = pneg %p67
        $region14: #{tpu_custom_call.1} parent=11 // pred_check_branch
          %199 = sbr.rel (%p197) target = $region16
        $region15: #{tpu_custom_call.1} parent=11 // pred_region
          %201 = vsyncadd [#allocation6], 0
          %s202 = sshll.u32 %s1, 4
          %s203 = int_to_ptr.hbm [resolvable:$true] %s202
          %s204 = sshll.u32 [#allocation5], 4
          %s205 = int_to_ptr.vmem [resolvable:$true] %s204
          %210 = dma.hbm_to_vmem [thread:$0]  %s203, 512, %s205, [#allocation6], 64, 64, 4
        $region16: #{tpu_custom_call.1} parent=11 // pred_fallthru
          _
        // Predicated region
        $region17: #{tpu_custom_call.1} parent=11 // pred_check
          %p211 = pneg %p88
        $region18: #{tpu_custom_call.1} parent=11 // pred_check_branch
          %213 = sbr.rel (%p211) target = $region20
        $region19: #{tpu_custom_call.1} parent=11 // pred_region
          _
        $region20: #{tpu_custom_call.1} parent=11 // pred_fallthru
          _
        // Predicated region
        $region21: #{tpu_custom_call.1} parent=11 // pred_check
          %p214 = pneg %p109
        $region22: #{tpu_custom_call.1} parent=11 // pred_check_branch
          %216 = sbr.rel (%p214) target = $region24
        $region23: #{tpu_custom_call.1} parent=11 // pred_region
          %218 = vsyncadd [#allocation6], 0
          %s219 = sshll.u32 %s3, 4
          %s220 = int_to_ptr.hbm [resolvable:$true] %s219
          %s221 = sshll.u32 [#allocation7], 4
          %s222 = int_to_ptr.vmem [resolvable:$true] %s221
          %227 = dma.hbm_to_vmem [thread:$0]  %s220, 1024, %s222, [#allocation6], 128, 128, 8
        $region24: #{tpu_custom_call.1} parent=11 // pred_fallthru
          _
        // Predicated region
        $region25: #{tpu_custom_call.1} parent=11 // pred_check
          %p228 = pneg %p130
        $region26: #{tpu_custom_call.1} parent=11 // pred_check_branch
          %230 = sbr.rel (%p228) target = $region28
        $region27: #{tpu_custom_call.1} parent=11 // pred_region
          _
        $region28: #{tpu_custom_call.1} parent=11 // pred_fallthru
          _
      $region12: #{tpu_custom_call.1} parent=5 // pred_fallthru
        _
      %p231 = scmp.lt.s32.totalorder %s20, 2
      // Predicated region
      $region29: #{tpu_custom_call.1} parent=5 // pred_check
        %p232 = pneg %p231
      $region30: #{tpu_custom_call.1} parent=5 // pred_check_branch
        %234 = sbr.rel (%p232) target = $region32
      $region31: #{tpu_custom_call.1} parent=5 // pred_region
        // Predicated region
        $region33: #{tpu_custom_call.1} parent=31 // pred_check
          %p235 = pneg %p40
        $region34: #{tpu_custom_call.1} parent=31 // pred_check_branch
          %237 = sbr.rel (%p235) target = $region36
        $region35: #{tpu_custom_call.1} parent=31 // pred_region
          %s238 = sand.u32 %s30, 1
          %s239 = scalar_lea.sflag [#allocation3], %s238
          %s240 = sand.u32 %s30, 1
          %s241 = smul.addr %s240, 64
          %s242 = scalar_lea.vmem [#allocation2], %s241
          %244 = vsyncadd %s239, 0
          %s245 = smul.addr %s20, 8
          %s246 = scalar_lea.hbm %s0, %s245
          %s247 = sshll.u32 %s246, 4
          %s248 = int_to_ptr.hbm [resolvable:$true] %s247
          %s249 = sshll.u32 %s242, 4
          %s250 = int_to_ptr.vmem [resolvable:$true] %s249
          %255 = dma.hbm_to_vmem [thread:$0]  %s248, 1024, %s250, %s239, 256, 128, 8
        $region36: #{tpu_custom_call.1} parent=31 // pred_fallthru
          _
      $region32: #{tpu_custom_call.1} parent=5 // pred_fallthru
        _
      %p256 = scmp.le.s32.totalorder 1, %s20
      %p257 = scmp.lt.s32.totalorder %s20, 3
      %p258 = pnand %p256, %p257
      %p259 = pneg %p258
      // Predicated region
      $region37: #{tpu_custom_call.1} parent=5 // pred_check
        _
      $region38: #{tpu_custom_call.1} parent=5 // pred_check_branch
        %261 = sbr.rel (%p258) target = $region40
      $region39: #{tpu_custom_call.1} parent=5 // pred_region
        %s262 = ssub.s32 %s20, 1
        %s263 = sand.u32 %s33, 1
        %s264 = scalar_lea.sflag [#allocation3], %s263
        %s265 = sand.u32 %s33, 1
        %s266 = smul.addr %s265, 64
        %s267 = scalar_lea.vmem [#allocation2], %s266
        // Predicated region
        $region41: #{tpu_custom_call.1} parent=39 // pred_check
          %p268 = pneg %p46
        $region42: #{tpu_custom_call.1} parent=39 // pred_check_branch
          %270 = sbr.rel (%p268) target = $region44
        $region43: #{tpu_custom_call.1} parent=39 // pred_region
          %272 = dma.done %s264, 1024
        $region44: #{tpu_custom_call.1} parent=39 // pred_fallthru
          _
        // Predicated region
        $region45: #{tpu_custom_call.1} parent=39 // pred_check
          %p273 = pneg %p67
        $region46: #{tpu_custom_call.1} parent=39 // pred_check_branch
          %275 = sbr.rel (%p273) target = $region48
        $region47: #{tpu_custom_call.1} parent=39 // pred_region
          %277 = dma.done [#allocation6], 512
        $region48: #{tpu_custom_call.1} parent=39 // pred_fallthru
          _
        // Predicated region
        $region49: #{tpu_custom_call.1} parent=39 // pred_check
          %p278 = pneg %p109
        $region50: #{tpu_custom_call.1} parent=39 // pred_check_branch
          %280 = sbr.rel (%p278) target = $region52
        $region51: #{tpu_custom_call.1} parent=39 // pred_region
          %282 = dma.done [#allocation6], 1024
        $region52: #{tpu_custom_call.1} parent=39 // pred_fallthru
          _
        %s283 = sand.u32 %s33, 1
        %s284 = scalar_lea.sflag [#allocation3], %s283
        %s285 = sand.u32 %s33, 1
        %s286 = smul.addr %s285, 64
        %s287 = scalar_lea.vmem [#allocation2], %s286
        %p288 = pneg %p46
        %p289 = pneg %p43
        %p290 = pneg %p67
        %p291 = pneg %p64
        %p292 = pneg %p88
        %p293 = pneg %p85
        %p294 = pneg %p109
        %p295 = pneg %p106
        %p296 = pneg %p130
        %p297 = pneg %p127
        %p298 = pneg %p156
        %p299 = pneg %p153
        %s300 = sand.u32 %s143, 1
        %s301 = scalar_lea.sflag [#allocation4], %s300
        %s302 = sand.u32 %s143, 1
        %s303 = smul.addr %s302, 8
        %s304 = scalar_lea.vmem [#allocation8], %s303
        %p305 = pneg %p182
        %p306 = pneg %p179
        %p307 = scmp.lt.s32.totalorder %s25, 1
        %s308 = scalar_select %p307, %s25, 1
        %s309 = smul.addr %s308, 8
        %s310 = scalar_lea.vmem %s6, %s309
        %p311 = scmp.lt.s32.totalorder %s25, 1
        %s312 = scalar_select %p311, %s25, 1
        %s313 = smul.addr %s312, 8
        %s314 = scalar_lea.vmem %s6, %s313
        %v316 = vld [vmem:[#allocation5] sm:$0xf]
        %v317 = vld [vmem:[#allocation5 + $0x4] sm:$0xf]
        %v318 = vld [vmem:[#allocation5 + $0x8] sm:$0xf]
        %v319 = vld [vmem:[#allocation5 + $0xc] sm:$0xf]
        %v320 = vld [vmem:[#allocation5 + $0x10] sm:$0xf]
        %v321 = vld [vmem:[#allocation5 + $0x14] sm:$0xf]
        %v322 = vld [vmem:[#allocation5 + $0x18] sm:$0xf]
        %v323 = vld [vmem:[#allocation5 + $0x1c] sm:$0xf]
        %v324 = vld [vmem:[%s2] sm:$0x1]
        %v325 = vld [vmem:[#allocation7] sm:$0xff]
        %v326 = vld [vmem:[#allocation7 + $0x8] sm:$0xff]
        %v327 = vld [vmem:[#allocation7 + $0x10] sm:$0xff]
        %v328 = vld [vmem:[#allocation7 + $0x18] sm:$0xff]
        %v329 = vld [vmem:[#allocation7 + $0x20] sm:$0xff]
        %v330 = vld [vmem:[#allocation7 + $0x28] sm:$0xff]
        %v331 = vld [vmem:[#allocation7 + $0x30] sm:$0xff]
        %v332 = vld [vmem:[#allocation7 + $0x38] sm:$0xff]
        %v333 = vld [vmem:[%s4] sm:$0x3]
        %v334 = vld [vmem:[%s267] sm:$0xff]
        %vm335 = vcmask 261120
        %v336 = vsel %vm335, %v334, 0.0
        %v337 = vpack.c.bf16 %v336, %v336
        %v339 = vperm.slane %v324, 0
        %v349 = vunpack.c.l.b16 %v316
        %v350 = vunpack.c.l.b16 %v317
        %v351 = vunpack.c.l.b16 %v318
        %v352 = vunpack.c.l.b16 %v319
        %v353 = vunpack.c.l.b16 %v320
        %v354 = vunpack.c.l.b16 %v321
        %v355 = vunpack.c.l.b16 %v322
        %v356 = vunpack.c.l.b16 %v323
        %v357 = vpack.c.b16 %v350, %v349
        %v358 = vpack.c.b16 %v352, %v351
        %v359 = vpack.c.b16 %v354, %v353
        %v360 = vpack.c.b16 %v356, %v355
        %vm365 = vcmask 523264
        %v367 = vsel %vm365, %v337, 0
        %369 = vmatpush.bf16.msra.mxu0 0
        %370 = vmatpush.bf16.msra.mxu0 0
        %371 = vmatpush.bf16.msra.mxu0 0
        %372 = vmatpush.bf16.msra.mxu0 0
        %373 = vmatpush.bf16.msra.mxu0 %v360
        %374 = vmatpush.bf16.msra.mxu0 %v359
        %375 = vmatpush.bf16.msra.mxu0 %v358
        %376 = vmatpush.bf16.msra.mxu0 %v357
        %377 = vmatmul.bf16.gmra.mxu0 %v367
        %v378 = vpop.f32.mrf.mxu0
        %v379 = vadd.f32 %v339, %v378
        %v380 = vpop.f32.mrf.mxu0
        %381 = vdwg.mxu0
        %v382 = vxor.u32 %v379, 2147483648
        %v383 = vmul.f32 %v382, 1.442695
        %v384 = vpow.pop %v383
        %v385 = vadd.f32 %v384, 1.0
        %v386 = vrcp.pop %v385
        %v387 = vmul.f32 %v385, %v386
        %v388 = vsub.f32 1.0, %v387
        %v389 = vmul.f32 %v386, %v388
        %v390 = vadd.f32 %v386, %v389
        %vm391 = vweird.f32 %v385
        %vm392 = vweird.f32 %v386
        %vm393 = vmor %vm391, %vm392
        %v394 = vsel %vm393, %v386, %v390
        %v395 = vand.u32 2147483647, %v385
        %vm396 = vcmp.eq.f32.partialorder %v395, 8.507059e+37
        %v397 = vand.u32 %v385, 2147483648
        %v398 = vor.u32 1.1754944e-38, %v397
        %v399 = vsel %vm396, %v398, %v394
        %v400 = vmul.f32 1.0, %v399
        %v401 = vtanh.pop %v379
        %v402 = vmul.f32 %v400, 0.0
        %404 = vrot.lane.b32.xlu0 %v401, 32
        %v405 = vpop.permute.xlu0 %404
        %v407 = vmul.f32 %v400, %v405
        %409 = vrot.lane.b32.xlu0 %v407, 32
        %v410 = vpop.permute.xlu0 %409
        %v412 = vadd.f32 %v402, %v410
        %v413 = vtanh.pop %v412
        %415 = vrot.lane.b32.xlu0 %v413, 32
        %v416 = vpop.permute.xlu0 %415
        %v418 = vmul.f32 %v400, %v416
        %420 = vrot.lane.b32.xlu0 %v418, 64
        %v421 = vpop.permute.xlu0 %420
        %v423 = vsel %vm335, %v421, 0.0
        %v424 = vpack.c.bf16 %v423, %v423
        %v426 = vperm.slane %v333, 0
        %v427 = vperm.slane %v333, 1
        %v438 = vunpack.c.l.b16 %v325
        %v439 = vunpack.c.h.b16 %v325
        %v440 = vunpack.c.l.b16 %v326
        %v441 = vunpack.c.h.b16 %v326
        %v442 = vunpack.c.l.b16 %v327
        %v443 = vunpack.c.h.b16 %v327
        %v444 = vunpack.c.l.b16 %v328
        %v445 = vunpack.c.h.b16 %v328
        %v446 = vunpack.c.l.b16 %v329
        %v447 = vunpack.c.h.b16 %v329
        %v448 = vunpack.c.l.b16 %v330
        %v449 = vunpack.c.h.b16 %v330
        %v450 = vunpack.c.l.b16 %v331
        %v451 = vunpack.c.h.b16 %v331
        %v452 = vunpack.c.l.b16 %v332
        %v453 = vunpack.c.h.b16 %v332
        %v454 = vpack.c.b16 %v440, %v438
        %v455 = vpack.c.b16 %v441, %v439
        %v456 = vpack.c.b16 %v444, %v442
        %v457 = vpack.c.b16 %v445, %v443
        %v458 = vpack.c.b16 %v448, %v446
        %v459 = vpack.c.b16 %v449, %v447
        %v460 = vpack.c.b16 %v452, %v450
        %v461 = vpack.c.b16 %v453, %v451
        %v471 = vsel %vm365, %v424, 0
        %473 = vmatpush.bf16.msra.mxu0 0
        %474 = vmatpush.bf16.msra.mxu0 0
        %475 = vmatpush.bf16.msra.mxu0 0
        %476 = vmatpush.bf16.msra.mxu0 0
        %477 = vmatpush.bf16.msra.mxu0 %v460
        %478 = vmatpush.bf16.msra.mxu0 %v458
        %479 = vmatpush.bf16.msra.mxu0 %v456
        %480 = vmatpush.bf16.msra.mxu0 %v454
        %481 = vmatmul.bf16.gmra.mxu0 %v471
        %v482 = vpop.f32.mrf.mxu0
        %v483 = vadd.f32 %v426, %v482
        %v484 = vpop.f32.mrf.mxu0
        %485 = vdwg.mxu0
        %486 = vmatpush.bf16.msra.mxu0 0
        %487 = vmatpush.bf16.msra.mxu0 0
        %488 = vmatpush.bf16.msra.mxu0 0
        %489 = vmatpush.bf16.msra.mxu0 0
        %490 = vmatpush.bf16.msra.mxu0 %v461
        %491 = vmatpush.bf16.msra.mxu0 %v459
        %492 = vmatpush.bf16.msra.mxu0 %v457
        %493 = vmatpush.bf16.msra.mxu0 %v455
        %494 = vmatmul.bf16.gmra.mxu0 %v471
        %v495 = vpop.f32.mrf.mxu0
        %v496 = vadd.f32 %v427, %v495
        %v497 = vpop.f32.mrf.mxu0
        %498 = vdwg.mxu0
        %v499 = vxor.u32 %v483, 2147483648
        %v500 = vmul.f32 %v499, 1.442695
        %v501 = vpow.pop %v500
        %v502 = vadd.f32 %v501, 1.0
        %v503 = vrcp.pop %v502
        %v504 = vmul.f32 %v502, %v503
        %v505 = vsub.f32 1.0, %v504
        %v506 = vmul.f32 %v503, %v505
        %v507 = vadd.f32 %v503, %v506
        %vm508 = vweird.f32 %v502
        %vm509 = vweird.f32 %v503
        %vm510 = vmor %vm508, %vm509
        %v511 = vsel %vm510, %v503, %v507
        %v512 = vand.u32 2147483647, %v502
        %vm513 = vcmp.eq.f32.partialorder %v512, 8.507059e+37
        %v514 = vand.u32 %v502, 2147483648
        %v515 = vor.u32 1.1754944e-38, %v514
        %v516 = vsel %vm513, %v515, %v511
        %v517 = vmul.f32 1.0, %v516
        %v518 = vtanh.pop %v496
        %v519 = vmul.f32 %v517, 0.0
        %v520 = vmul.f32 %v517, %v518
        %522 = vrot.lane.b32.xlu0 %v520, 32
        %v523 = vpop.permute.xlu0 %522
        %v525 = vadd.f32 %v519, %v523
        %v526 = vtanh.pop %v525
        %528 = vrot.lane.b32.xlu0 %v526, 32
        %v529 = vpop.permute.xlu0 %528
        %v531 = vmul.f32 %v517, %v529
        %533 = vrot.lane.b32.xlu0 %v531, 32
        %v534 = vpop.permute.xlu0 %533
        %v536 = vmul.f32 %v517, %v534
        %v537 = vsub.f32 1.0, %v517
        %v538 = vmul.f32 %v537, 0.0
        %v539 = vadd.f32 %v536, %v538
        %541 = vrot.lane.b32.xlu0 %v525, 64
        %v542 = vpop.permute.xlu0 %541
        %v544 = vmul.f32 %v517, %v542
        %v545 = vadd.f32 %v544, %v538
        %547 = vrot.lane.b32.xlu0 %v517, 32
        %v548 = vpop.permute.xlu0 %547
        %vm550 = vcmask 7168
        %551 = vst.msk [vmem:[%s314] sm:$0xff] %vm550, %v548
        %553 = vrot.lane.b32.xlu0 %v537, 96
        %v554 = vpop.permute.xlu0 %553
        %v556 = vmul.f32 %v418, %v554
        %557 = vrot.lane.b32.xlu0 %v537, 64
        %v558 = vpop.permute.xlu0 %557
        %v560 = vmul.f32 %v412, %v558
        %s561 = scalar_lea.vmem %s267, 8 [#allocation2]
        %v562 = vld [vmem:[%s561] sm:$0xff]
        %564 = vrot.lane.b32.xlu0 %v556, 96
        %v565 = vpop.permute.xlu0 %564
        %v567 = vsel %vm335, %v562, %v565
        %v568 = vpack.c.bf16 %v567, %v567
        %v570 = vsel %vm365, %v568, 0
        %572 = vmatpush.bf16.msra.mxu0 0
        %573 = vmatpush.bf16.msra.mxu0 0
        %574 = vmatpush.bf16.msra.mxu0 0
        %575 = vmatpush.bf16.msra.mxu0 0
        %576 = vmatpush.bf16.msra.mxu0 %v360
        %577 = vmatpush.bf16.msra.mxu0 %v359
        %578 = vmatpush.bf16.msra.mxu0 %v358
        %579 = vmatpush.bf16.msra.mxu0 %v357
        %580 = vmatmul.bf16.gmra.mxu0 %v570
        %v581 = vpop.f32.mrf.mxu0
        %v582 = vadd.f32 %v339, %v581
        %v583 = vpop.f32.mrf.mxu0
        %584 = vdwg.mxu0
        %v585 = vxor.u32 %v582, 2147483648
        %v586 = vmul.f32 %v585, 1.442695
        %v587 = vpow.pop %v586
        %v588 = vadd.f32 %v587, 1.0
        %v589 = vrcp.pop %v588
        %v590 = vmul.f32 %v588, %v589
        %v591 = vsub.f32 1.0, %v590
        %v592 = vmul.f32 %v589, %v591
        %v593 = vadd.f32 %v589, %v592
        %vm594 = vweird.f32 %v588
        %vm595 = vweird.f32 %v589
        %vm596 = vmor %vm594, %vm595
        %v597 = vsel %vm596, %v589, %v593
        %v598 = vand.u32 2147483647, %v588
        %vm599 = vcmp.eq.f32.partialorder %v598, 8.507059e+37
        %v600 = vand.u32 %v588, 2147483648
        %v601 = vor.u32 1.1754944e-38, %v600
        %v602 = vsel %vm599, %v601, %v597
        %v603 = vmul.f32 1.0, %v602
        %v604 = vtanh.pop %v582
        %v605 = vmul.f32 %v603, %v560
        %607 = vrot.lane.b32.xlu0 %v604, 32
        %v608 = vpop.permute.xlu0 %607
        %v610 = vmul.f32 %v603, %v608
        %612 = vrot.lane.b32.xlu0 %v610, 32
        %v613 = vpop.permute.xlu0 %612
        %v615 = vadd.f32 %v605, %v613
        %v616 = vtanh.pop %v615
        %618 = vrot.lane.b32.xlu0 %v616, 32
        %v619 = vpop.permute.xlu0 %618
        %v621 = vmul.f32 %v603, %v619
        %623 = vrot.lane.b32.xlu0 %v621, 64
        %v624 = vpop.permute.xlu0 %623
        %627 = vrot.lane.b32.xlu0 %v539, 64
        %v628 = vpop.permute.xlu0 %627
        %v630 = vsel %vm335, %v624, %v628
        %v631 = vpack.c.bf16 %v630, %v630
        %v633 = vsel %vm365, %v631, 0
        %635 = vmatpush.bf16.msra.mxu0 0
        %636 = vmatpush.bf16.msra.mxu0 0
        %637 = vmatpush.bf16.msra.mxu0 0
        %638 = vmatpush.bf16.msra.mxu0 0
        %639 = vmatpush.bf16.msra.mxu0 %v460
        %640 = vmatpush.bf16.msra.mxu0 %v458
        %641 = vmatpush.bf16.msra.mxu0 %v456
        %642 = vmatpush.bf16.msra.mxu0 %v454
        %643 = vmatmul.bf16.gmra.mxu0 %v633
        %v644 = vpop.f32.mrf.mxu0
        %v645 = vadd.f32 %v426, %v644
        %v646 = vpop.f32.mrf.mxu0
        %647 = vdwg.mxu0
        %648 = vmatpush.bf16.msra.mxu0 0
        %649 = vmatpush.bf16.msra.mxu0 0
        %650 = vmatpush.bf16.msra.mxu0 0
        %651 = vmatpush.bf16.msra.mxu0 0
        %652 = vmatpush.bf16.msra.mxu0 %v461
        %653 = vmatpush.bf16.msra.mxu0 %v459
        %654 = vmatpush.bf16.msra.mxu0 %v457
        %655 = vmatpush.bf16.msra.mxu0 %v455
        %656 = vmatmul.bf16.gmra.mxu0 %v633
        %v657 = vpop.f32.mrf.mxu0
        %v658 = vadd.f32 %v427, %v657
        %v659 = vpop.f32.mrf.mxu0
        %660 = vdwg.mxu0
        %v661 = vxor.u32 %v645, 2147483648
        %v662 = vmul.f32 %v661, 1.442695
        %v663 = vpow.pop %v662
        %v664 = vadd.f32 %v663, 1.0
        %v665 = vrcp.pop %v664
        %v666 = vmul.f32 %v664, %v665
        %v667 = vsub.f32 1.0, %v666
        %v668 = vmul.f32 %v665, %v667
        %v669 = vadd.f32 %v665, %v668
        %vm670 = vweird.f32 %v664
        %vm671 = vweird.f32 %v665
        %vm672 = vmor %vm670, %vm671
        %v673 = vsel %vm672, %v665, %v669
        %v674 = vand.u32 2147483647, %v664
        %vm675 = vcmp.eq.f32.partialorder %v674, 8.507059e+37
        %v676 = vand.u32 %v664, 2147483648
        %v677 = vor.u32 1.1754944e-38, %v676
        %v678 = vsel %vm675, %v677, %v673
        %v679 = vmul.f32 1.0, %v678
        %v680 = vtanh.pop %v658
        %682 = vrot.lane.b32.xlu0 %v545, 64
        %v683 = vpop.permute.xlu0 %682
        %v685 = vmul.f32 %v679, %v683
        %v686 = vmul.f32 %v679, %v680
        %688 = vrot.lane.b32.xlu0 %v686, 32
        %v689 = vpop.permute.xlu0 %688
        %v691 = vadd.f32 %v685, %v689
        %v692 = vtanh.pop %v691
        %694 = vrot.lane.b32.xlu0 %v692, 32
        %v695 = vpop.permute.xlu0 %694
        %v697 = vmul.f32 %v679, %v695
        %699 = vrot.lane.b32.xlu0 %v697, 32
        %v700 = vpop.permute.xlu0 %699
        %v702 = vmul.f32 %v679, %v700
        %v703 = vsub.f32 1.0, %v679
        %v704 = vmul.f32 %v703, %v539
        %v705 = vadd.f32 %v702, %v704
        %707 = vrot.lane.b32.xlu0 %v691, 64
        %v708 = vpop.permute.xlu0 %707
        %v710 = vmul.f32 %v679, %v708
        %v711 = vmul.f32 %v703, %v545
        %v712 = vadd.f32 %v710, %v711
        %714 = vrot.lane.b32.xlu0 %v679, 33
        %v715 = vpop.permute.xlu0 %714
        %vm717 = vcmask 15368
        %718 = vst.msk [vmem:[%s314] sm:$0xff] %vm717, %v715
        %720 = vrot.lane.b32.xlu0 %v703, 96
        %v721 = vpop.permute.xlu0 %720
        %v723 = vmul.f32 %v621, %v721
        %724 = vrot.lane.b32.xlu0 %v703, 64
        %v725 = vpop.permute.xlu0 %724
        %v727 = vmul.f32 %v615, %v725
        %s728 = scalar_lea.vmem %s267, 16 [#allocation2]
        %v729 = vld [vmem:[%s728] sm:$0xff]
        %731 = vrot.lane.b32.xlu0 %v723, 96
        %v732 = vpop.permute.xlu0 %731
        %v734 = vsel %vm335, %v729, %v732
        %v735 = vpack.c.bf16 %v734, %v734
        %v737 = vsel %vm365, %v735, 0
        %739 = vmatpush.bf16.msra.mxu0 0
        %740 = vmatpush.bf16.msra.mxu0 0
        %741 = vmatpush.bf16.msra.mxu0 0
        %742 = vmatpush.bf16.msra.mxu0 0
        %743 = vmatpush.bf16.msra.mxu0 %v360
        %744 = vmatpush.bf16.msra.mxu0 %v359
        %745 = vmatpush.bf16.msra.mxu0 %v358
        %746 = vmatpush.bf16.msra.mxu0 %v357
        %747 = vmatmul.bf16.gmra.mxu0 %v737
        %v748 = vpop.f32.mrf.mxu0
        %v749 = vadd.f32 %v339, %v748
        %v750 = vpop.f32.mrf.mxu0
        %751 = vdwg.mxu0
        %v752 = vxor.u32 %v749, 2147483648
        %v753 = vmul.f32 %v752, 1.442695
        %v754 = vpow.pop %v753
        %v755 = vadd.f32 %v754, 1.0
        %v756 = vrcp.pop %v755
        %v757 = vmul.f32 %v755, %v756
        %v758 = vsub.f32 1.0, %v757
        %v759 = vmul.f32 %v756, %v758
        %v760 = vadd.f32 %v756, %v759
        %vm761 = vweird.f32 %v755
        %vm762 = vweird.f32 %v756
        %vm763 = vmor %vm761, %vm762
        %v764 = vsel %vm763, %v756, %v760
        %v765 = vand.u32 2147483647, %v755
        %vm766 = vcmp.eq.f32.partialorder %v765, 8.507059e+37
        %v767 = vand.u32 %v755, 2147483648
        %v768 = vor.u32 1.1754944e-38, %v767
        %v769 = vsel %vm766, %v768, %v764
        %v770 = vmul.f32 1.0, %v769
        %v771 = vtanh.pop %v749
        %v772 = vmul.f32 %v770, %v727
        %774 = vrot.lane.b32.xlu0 %v771, 32
        %v775 = vpop.permute.xlu0 %774
        %v777 = vmul.f32 %v770, %v775
        %779 = vrot.lane.b32.xlu0 %v777, 32
        %v780 = vpop.permute.xlu0 %779
        %v782 = vadd.f32 %v772, %v780
        %v783 = vtanh.pop %v782
        %785 = vrot.lane.b32.xlu0 %v783, 32
        %v786 = vpop.permute.xlu0 %785
        %v788 = vmul.f32 %v770, %v786
        %790 = vrot.lane.b32.xlu0 %v788, 64
        %v791 = vpop.permute.xlu0 %790
        %794 = vrot.lane.b32.xlu0 %v705, 64
        %v795 = vpop.permute.xlu0 %794
        %v797 = vsel %vm335, %v791, %v795
        %v798 = vpack.c.bf16 %v797, %v797
        %v800 = vsel %vm365, %v798, 0
        %802 = vmatpush.bf16.msra.mxu0 0
        %803 = vmatpush.bf16.msra.mxu0 0
        %804 = vmatpush.bf16.msra.mxu0 0
        %805 = vmatpush.bf16.msra.mxu0 0
        %806 = vmatpush.bf16.msra.mxu0 %v460
        %807 = vmatpush.bf16.msra.mxu0 %v458
        %808 = vmatpush.bf16.msra.mxu0 %v456
        %809 = vmatpush.bf16.msra.mxu0 %v454
        %810 = vmatmul.bf16.gmra.mxu0 %v800
        %v811 = vpop.f32.mrf.mxu0
        %v812 = vadd.f32 %v426, %v811
        %v813 = vpop.f32.mrf.mxu0
        %814 = vdwg.mxu0
        %815 = vmatpush.bf16.msra.mxu0 0
        %816 = vmatpush.bf16.msra.mxu0 0
        %817 = vmatpush.bf16.msra.mxu0 0
        %818 = vmatpush.bf16.msra.mxu0 0
        %819 = vmatpush.bf16.msra.mxu0 %v461
        %820 = vmatpush.bf16.msra.mxu0 %v459
        %821 = vmatpush.bf16.msra.mxu0 %v457
        %822 = vmatpush.bf16.msra.mxu0 %v455
        %823 = vmatmul.bf16.gmra.mxu0 %v800
        %v824 = vpop.f32.mrf.mxu0
        %v825 = vadd.f32 %v427, %v824
        %v826 = vpop.f32.mrf.mxu0
        %827 = vdwg.mxu0
        %v828 = vxor.u32 %v812, 2147483648
        %v829 = vmul.f32 %v828, 1.442695
        %v830 = vpow.pop %v829
        %v831 = vadd.f32 %v830, 1.0
        %v832 = vrcp.pop %v831
        %v833 = vmul.f32 %v831, %v832
        %v834 = vsub.f32 1.0, %v833
        %v835 = vmul.f32 %v832, %v834
        %v836 = vadd.f32 %v832, %v835
        %vm837 = vweird.f32 %v831
        %vm838 = vweird.f32 %v832
        %vm839 = vmor %vm837, %vm838
        %v840 = vsel %vm839, %v832, %v836
        %v841 = vand.u32 2147483647, %v831
        %vm842 = vcmp.eq.f32.partialorder %v841, 8.507059e+37
        %v843 = vand.u32 %v831, 2147483648
        %v844 = vor.u32 1.1754944e-38, %v843
        %v845 = vsel %vm842, %v844, %v840
        %v846 = vmul.f32 1.0, %v845
        %v847 = vtanh.pop %v825
        %849 = vrot.lane.b32.xlu0 %v712, 64
        %v850 = vpop.permute.xlu0 %849
        %v852 = vmul.f32 %v846, %v850
        %v853 = vmul.f32 %v846, %v847
        %855 = vrot.lane.b32.xlu0 %v853, 32
        %v856 = vpop.permute.xlu0 %855
        %v858 = vadd.f32 %v852, %v856
        %v859 = vtanh.pop %v858
        %861 = vrot.lane.b32.xlu0 %v859, 32
        %v862 = vpop.permute.xlu0 %861
        %v864 = vmul.f32 %v846, %v862
        %866 = vrot.lane.b32.xlu0 %v864, 32
        %v867 = vpop.permute.xlu0 %866
        %v869 = vmul.f32 %v846, %v867
        %v870 = vsub.f32 1.0, %v846
        %v871 = vmul.f32 %v870, %v705
        %v872 = vadd.f32 %v869, %v871
        %874 = vrot.lane.b32.xlu0 %v858, 64
        %v875 = vpop.permute.xlu0 %874
        %v877 = vmul.f32 %v846, %v875
        %v878 = vmul.f32 %v870, %v712
        %v879 = vadd.f32 %v877, %v878
        %881 = vrot.lane.b32.xlu0 %v846, 34
        %v882 = vpop.permute.xlu0 %881
        %vm884 = vcmask 23568
        %885 = vst.msk [vmem:[%s314] sm:$0xff] %vm884, %v882
        %887 = vrot.lane.b32.xlu0 %v870, 96
        %v888 = vpop.permute.xlu0 %887
        %v890 = vmul.f32 %v788, %v888
        %891 = vrot.lane.b32.xlu0 %v870, 64
        %v892 = vpop.permute.xlu0 %891
        %v894 = vmul.f32 %v782, %v892
        %s895 = scalar_lea.vmem %s267, 24 [#allocation2]
        %v896 = vld [vmem:[%s895] sm:$0xff]
        %898 = vrot.lane.b32.xlu0 %v890, 96
        %v899 = vpop.permute.xlu0 %898
        %v901 = vsel %vm335, %v896, %v899
        %v902 = vpack.c.bf16 %v901, %v901
        %v904 = vsel %vm365, %v902, 0
        %906 = vmatpush.bf16.msra.mxu0 0
        %907 = vmatpush.bf16.msra.mxu0 0
        %908 = vmatpush.bf16.msra.mxu0 0
        %909 = vmatpush.bf16.msra.mxu0 0
        %910 = vmatpush.bf16.msra.mxu0 %v360
        %911 = vmatpush.bf16.msra.mxu0 %v359
        %912 = vmatpush.bf16.msra.mxu0 %v358
        %913 = vmatpush.bf16.msra.mxu0 %v357
        %914 = vmatmul.bf16.gmra.mxu0 %v904
        %v915 = vpop.f32.mrf.mxu0
        %v916 = vadd.f32 %v339, %v915
        %v917 = vpop.f32.mrf.mxu0
        %918 = vdwg.mxu0
        %v919 = vxor.u32 %v916, 2147483648
        %v920 = vmul.f32 %v919, 1.442695
        %v921 = vpow.pop %v920
        %v922 = vadd.f32 %v921, 1.0
        %v923 = vrcp.pop %v922
        %v924 = vmul.f32 %v922, %v923
        %v925 = vsub.f32 1.0, %v924
        %v926 = vmul.f32 %v923, %v925
        %v927 = vadd.f32 %v923, %v926
        %vm928 = vweird.f32 %v922
        %vm929 = vweird.f32 %v923
        %vm930 = vmor %vm928, %vm929
        %v931 = vsel %vm930, %v923, %v927
        %v932 = vand.u32 2147483647, %v922
        %vm933 = vcmp.eq.f32.partialorder %v932, 8.507059e+37
        %v934 = vand.u32 %v922, 2147483648
        %v935 = vor.u32 1.1754944e-38, %v934
        %v936 = vsel %vm933, %v935, %v931
        %v937 = vmul.f32 1.0, %v936
        %v938 = vtanh.pop %v916
        %v939 = vmul.f32 %v937, %v894
        %941 = vrot.lane.b32.xlu0 %v938, 32
        %v942 = vpop.permute.xlu0 %941
        %v944 = vmul.f32 %v937, %v942
        %946 = vrot.lane.b32.xlu0 %v944, 32
        %v947 = vpop.permute.xlu0 %946
        %v949 = vadd.f32 %v939, %v947
        %v950 = vtanh.pop %v949
        %952 = vrot.lane.b32.xlu0 %v950, 32
        %v953 = vpop.permute.xlu0 %952
        %v955 = vmul.f32 %v937, %v953
        %957 = vrot.lane.b32.xlu0 %v955, 64
        %v958 = vpop.permute.xlu0 %957
        %961 = vrot.lane.b32.xlu0 %v872, 64
        %v962 = vpop.permute.xlu0 %961
        %v964 = vsel %vm335, %v958, %v962
        %v965 = vpack.c.bf16 %v964, %v964
        %v967 = vsel %vm365, %v965, 0
        %969 = vmatpush.bf16.msra.mxu0 0
        %970 = vmatpush.bf16.msra.mxu0 0
        %971 = vmatpush.bf16.msra.mxu0 0
        %972 = vmatpush.bf16.msra.mxu0 0
        %973 = vmatpush.bf16.msra.mxu0 %v460
        %974 = vmatpush.bf16.msra.mxu0 %v458
        %975 = vmatpush.bf16.msra.mxu0 %v456
        %976 = vmatpush.bf16.msra.mxu0 %v454
        %977 = vmatmul.bf16.gmra.mxu0 %v967
        %v978 = vpop.f32.mrf.mxu0
        %v979 = vadd.f32 %v426, %v978
        %v980 = vpop.f32.mrf.mxu0
        %981 = vdwg.mxu0
        %982 = vmatpush.bf16.msra.mxu0 0
        %983 = vmatpush.bf16.msra.mxu0 0
        %984 = vmatpush.bf16.msra.mxu0 0
        %985 = vmatpush.bf16.msra.mxu0 0
        %986 = vmatpush.bf16.msra.mxu0 %v461
        %987 = vmatpush.bf16.msra.mxu0 %v459
        %988 = vmatpush.bf16.msra.mxu0 %v457
        %989 = vmatpush.bf16.msra.mxu0 %v455
        %990 = vmatmul.bf16.gmra.mxu0 %v967
        %v991 = vpop.f32.mrf.mxu0
        %v992 = vadd.f32 %v427, %v991
        %v993 = vpop.f32.mrf.mxu0
        %994 = vdwg.mxu0
        %v995 = vxor.u32 %v979, 2147483648
        %v996 = vmul.f32 %v995, 1.442695
        %v997 = vpow.pop %v996
        %v998 = vadd.f32 %v997, 1.0
        %v999 = vrcp.pop %v998
        %v1000 = vmul.f32 %v998, %v999
        %v1001 = vsub.f32 1.0, %v1000
        %v1002 = vmul.f32 %v999, %v1001
        %v1003 = vadd.f32 %v999, %v1002
        %vm1004 = vweird.f32 %v998
        %vm1005 = vweird.f32 %v999
        %vm1006 = vmor %vm1004, %vm1005
        %v1007 = vsel %vm1006, %v999, %v1003
        %v1008 = vand.u32 2147483647, %v998
        %vm1009 = vcmp.eq.f32.partialorder %v1008, 8.507059e+37
        %v1010 = vand.u32 %v998, 2147483648
        %v1011 = vor.u32 1.1754944e-38, %v1010
        %v1012 = vsel %vm1009, %v1011, %v1007
        %v1013 = vmul.f32 1.0, %v1012
        %v1014 = vtanh.pop %v992
        %1016 = vrot.lane.b32.xlu0 %v879, 64
        %v1017 = vpop.permute.xlu0 %1016
        %v1019 = vmul.f32 %v1013, %v1017
        %v1020 = vmul.f32 %v1013, %v1014
        %1022 = vrot.lane.b32.xlu0 %v1020, 32
        %v1023 = vpop.permute.xlu0 %1022
        %v1025 = vadd.f32 %v1019, %v1023
        %v1026 = vtanh.pop %v1025
        %1028 = vrot.lane.b32.xlu0 %v1026, 32
        %v1029 = vpop.permute.xlu0 %1028
        %v1031 = vmul.f32 %v1013, %v1029
        %1033 = vrot.lane.b32.xlu0 %v1031, 32
        %v1034 = vpop.permute.xlu0 %1033
        %v1036 = vmul.f32 %v1013, %v1034
        %v1037 = vsub.f32 1.0, %v1013
        %v1038 = vmul.f32 %v1037, %v872
        %v1039 = vadd.f32 %v1036, %v1038
        %1041 = vrot.lane.b32.xlu0 %v1025, 64
        %v1042 = vpop.permute.xlu0 %1041
        %v1044 = vmul.f32 %v1013, %v1042
        %v1045 = vmul.f32 %v1037, %v879
        %v1046 = vadd.f32 %v1044, %v1045
        %1048 = vrot.lane.b32.xlu0 %v1013, 35
        %v1049 = vpop.permute.xlu0 %1048
        %vm1051 = vcmask 31768
        %1052 = vst.msk [vmem:[%s314] sm:$0xff] %vm1051, %v1049
        %1054 = vrot.lane.b32.xlu0 %v1037, 96
        %v1055 = vpop.permute.xlu0 %1054
        %v1057 = vmul.f32 %v955, %v1055
        %1058 = vrot.lane.b32.xlu0 %v1037, 64
        %v1059 = vpop.permute.xlu0 %1058
        %v1061 = vmul.f32 %v949, %v1059
        %s1062 = scalar_lea.vmem %s267, 32 [#allocation2]
        %v1063 = vld [vmem:[%s1062] sm:$0xff]
        %1065 = vrot.lane.b32.xlu0 %v1057, 96
        %v1066 = vpop.permute.xlu0 %1065
        %v1068 = vsel %vm335, %v1063, %v1066
        %v1069 = vpack.c.bf16 %v1068, %v1068
        %v1071 = vsel %vm365, %v1069, 0
        %1073 = vmatpush.bf16.msra.mxu0 0
        %1074 = vmatpush.bf16.msra.mxu0 0
        %1075 = vmatpush.bf16.msra.mxu0 0
        %1076 = vmatpush.bf16.msra.mxu0 0
        %1077 = vmatpush.bf16.msra.mxu0 %v360
        %1078 = vmatpush.bf16.msra.mxu0 %v359
        %1079 = vmatpush.bf16.msra.mxu0 %v358
        %1080 = vmatpush.bf16.msra.mxu0 %v357
        %1081 = vmatmul.bf16.gmra.mxu0 %v1071
        %v1082 = vpop.f32.mrf.mxu0
        %v1083 = vadd.f32 %v339, %v1082
        %v1084 = vpop.f32.mrf.mxu0
        %1085 = vdwg.mxu0
        %v1086 = vxor.u32 %v1083, 2147483648
        %v1087 = vmul.f32 %v1086, 1.442695
        %v1088 = vpow.pop %v1087
        %v1089 = vadd.f32 %v1088, 1.0
        %v1090 = vrcp.pop %v1089
        %v1091 = vmul.f32 %v1089, %v1090
        %v1092 = vsub.f32 1.0, %v1091
        %v1093 = vmul.f32 %v1090, %v1092
        %v1094 = vadd.f32 %v1090, %v1093
        %vm1095 = vweird.f32 %v1089
        %vm1096 = vweird.f32 %v1090
        %vm1097 = vmor %vm1095, %vm1096
        %v1098 = vsel %vm1097, %v1090, %v1094
        %v1099 = vand.u32 2147483647, %v1089
        %vm1100 = vcmp.eq.f32.partialorder %v1099, 8.507059e+37
        %v1101 = vand.u32 %v1089, 2147483648
        %v1102 = vor.u32 1.1754944e-38, %v1101
        %v1103 = vsel %vm1100, %v1102, %v1098
        %v1104 = vmul.f32 1.0, %v1103
        %v1105 = vtanh.pop %v1083
        %v1106 = vmul.f32 %v1104, %v1061
        %1108 = vrot.lane.b32.xlu0 %v1105, 32
        %v1109 = vpop.permute.xlu0 %1108
        %v1111 = vmul.f32 %v1104, %v1109
        %1113 = vrot.lane.b32.xlu0 %v1111, 32
        %v1114 = vpop.permute.xlu0 %1113
        %v1116 = vadd.f32 %v1106, %v1114
        %v1117 = vtanh.pop %v1116
        %1119 = vrot.lane.b32.xlu0 %v1117, 32
        %v1120 = vpop.permute.xlu0 %1119
        %v1122 = vmul.f32 %v1104, %v1120
        %1124 = vrot.lane.b32.xlu0 %v1122, 64
        %v1125 = vpop.permute.xlu0 %1124
        %1128 = vrot.lane.b32.xlu0 %v1039, 64
        %v1129 = vpop.permute.xlu0 %1128
        %v1131 = vsel %vm335, %v1125, %v1129
        %v1132 = vpack.c.bf16 %v1131, %v1131
        %v1134 = vsel %vm365, %v1132, 0
        %1136 = vmatpush.bf16.msra.mxu0 0
        %1137 = vmatpush.bf16.msra.mxu0 0
        %1138 = vmatpush.bf16.msra.mxu0 0
        %1139 = vmatpush.bf16.msra.mxu0 0
        %1140 = vmatpush.bf16.msra.mxu0 %v460
        %1141 = vmatpush.bf16.msra.mxu0 %v458
        %1142 = vmatpush.bf16.msra.mxu0 %v456
        %1143 = vmatpush.bf16.msra.mxu0 %v454
        %1144 = vmatmul.bf16.gmra.mxu0 %v1134
        %v1145 = vpop.f32.mrf.mxu0
        %v1146 = vadd.f32 %v426, %v1145
        %v1147 = vpop.f32.mrf.mxu0
        %1148 = vdwg.mxu0
        %1149 = vmatpush.bf16.msra.mxu0 0
        %1150 = vmatpush.bf16.msra.mxu0 0
        %1151 = vmatpush.bf16.msra.mxu0 0
        %1152 = vmatpush.bf16.msra.mxu0 0
        %1153 = vmatpush.bf16.msra.mxu0 %v461
        %1154 = vmatpush.bf16.msra.mxu0 %v459
        %1155 = vmatpush.bf16.msra.mxu0 %v457
        %1156 = vmatpush.bf16.msra.mxu0 %v455
        %1157 = vmatmul.bf16.gmra.mxu0 %v1134
        %v1158 = vpop.f32.mrf.mxu0
        %v1159 = vadd.f32 %v427, %v1158
        %v1160 = vpop.f32.mrf.mxu0
        %1161 = vdwg.mxu0
        %v1162 = vxor.u32 %v1146, 2147483648
        %v1163 = vmul.f32 %v1162, 1.442695
        %v1164 = vpow.pop %v1163
        %v1165 = vadd.f32 %v1164, 1.0
        %v1166 = vrcp.pop %v1165
        %v1167 = vmul.f32 %v1165, %v1166
        %v1168 = vsub.f32 1.0, %v1167
        %v1169 = vmul.f32 %v1166, %v1168
        %v1170 = vadd.f32 %v1166, %v1169
        %vm1171 = vweird.f32 %v1165
        %vm1172 = vweird.f32 %v1166
        %vm1173 = vmor %vm1171, %vm1172
        %v1174 = vsel %vm1173, %v1166, %v1170
        %v1175 = vand.u32 2147483647, %v1165
        %vm1176 = vcmp.eq.f32.partialorder %v1175, 8.507059e+37
        %v1177 = vand.u32 %v1165, 2147483648
        %v1178 = vor.u32 1.1754944e-38, %v1177
        %v1179 = vsel %vm1176, %v1178, %v1174
        %v1180 = vmul.f32 1.0, %v1179
        %v1181 = vtanh.pop %v1159
        %1183 = vrot.lane.b32.xlu0 %v1046, 64
        %v1184 = vpop.permute.xlu0 %1183
        %v1186 = vmul.f32 %v1180, %v1184
        %v1187 = vmul.f32 %v1180, %v1181
        %1189 = vrot.lane.b32.xlu0 %v1187, 32
        %v1190 = vpop.permute.xlu0 %1189
        %v1192 = vadd.f32 %v1186, %v1190
        %v1193 = vtanh.pop %v1192
        %1195 = vrot.lane.b32.xlu0 %v1193, 32
        %v1196 = vpop.permute.xlu0 %1195
        %v1198 = vmul.f32 %v1180, %v1196
        %1200 = vrot.lane.b32.xlu0 %v1198, 32
        %v1201 = vpop.permute.xlu0 %1200
        %v1203 = vmul.f32 %v1180, %v1201
        %v1204 = vsub.f32 1.0, %v1180
        %v1205 = vmul.f32 %v1204, %v1039
        %v1206 = vadd.f32 %v1203, %v1205
        %1208 = vrot.lane.b32.xlu0 %v1192, 64
        %v1209 = vpop.permute.xlu0 %1208
        %v1211 = vmul.f32 %v1180, %v1209
        %v1212 = vmul.f32 %v1204, %v1046
        %v1213 = vadd.f32 %v1211, %v1212
        %1215 = vrot.lane.b32.xlu0 %v1180, 36
        %v1216 = vpop.permute.xlu0 %1215
        %vm1218 = vcmask 39968
        %1219 = vst.msk [vmem:[%s314] sm:$0xff] %vm1218, %v1216
        %1221 = vrot.lane.b32.xlu0 %v1204, 96
        %v1222 = vpop.permute.xlu0 %1221
        %v1224 = vmul.f32 %v1122, %v1222
        %1225 = vrot.lane.b32.xlu0 %v1204, 64
        %v1226 = vpop.permute.xlu0 %1225
        %v1228 = vmul.f32 %v1116, %v1226
        %s1229 = scalar_lea.vmem %s267, 40 [#allocation2]
        %v1230 = vld [vmem:[%s1229] sm:$0xff]
        %1232 = vrot.lane.b32.xlu0 %v1224, 96
        %v1233 = vpop.permute.xlu0 %1232
        %v1235 = vsel %vm335, %v1230, %v1233
        %v1236 = vpack.c.bf16 %v1235, %v1235
        %v1238 = vsel %vm365, %v1236, 0
        %1240 = vmatpush.bf16.msra.mxu0 0
        %1241 = vmatpush.bf16.msra.mxu0 0
        %1242 = vmatpush.bf16.msra.mxu0 0
        %1243 = vmatpush.bf16.msra.mxu0 0
        %1244 = vmatpush.bf16.msra.mxu0 %v360
        %1245 = vmatpush.bf16.msra.mxu0 %v359
        %1246 = vmatpush.bf16.msra.mxu0 %v358
        %1247 = vmatpush.bf16.msra.mxu0 %v357
        %1248 = vmatmul.bf16.gmra.mxu0 %v1238
        %v1249 = vpop.f32.mrf.mxu0
        %v1250 = vadd.f32 %v339, %v1249
        %v1251 = vpop.f32.mrf.mxu0
        %1252 = vdwg.mxu0
        %v1253 = vxor.u32 %v1250, 2147483648
        %v1254 = vmul.f32 %v1253, 1.442695
        %v1255 = vpow.pop %v1254
        %v1256 = vadd.f32 %v1255, 1.0
        %v1257 = vrcp.pop %v1256
        %v1258 = vmul.f32 %v1256, %v1257
        %v1259 = vsub.f32 1.0, %v1258
        %v1260 = vmul.f32 %v1257, %v1259
        %v1261 = vadd.f32 %v1257, %v1260
        %vm1262 = vweird.f32 %v1256
        %vm1263 = vweird.f32 %v1257
        %vm1264 = vmor %vm1262, %vm1263
        %v1265 = vsel %vm1264, %v1257, %v1261
        %v1266 = vand.u32 2147483647, %v1256
        %vm1267 = vcmp.eq.f32.partialorder %v1266, 8.507059e+37
        %v1268 = vand.u32 %v1256, 2147483648
        %v1269 = vor.u32 1.1754944e-38, %v1268
        %v1270 = vsel %vm1267, %v1269, %v1265
        %v1271 = vmul.f32 1.0, %v1270
        %v1272 = vtanh.pop %v1250
        %v1273 = vmul.f32 %v1271, %v1228
        %1275 = vrot.lane.b32.xlu0 %v1272, 32
        %v1276 = vpop.permute.xlu0 %1275
        %v1278 = vmul.f32 %v1271, %v1276
        %1280 = vrot.lane.b32.xlu0 %v1278, 32
        %v1281 = vpop.permute.xlu0 %1280
        %v1283 = vadd.f32 %v1273, %v1281
        %v1284 = vtanh.pop %v1283
        %1286 = vrot.lane.b32.xlu0 %v1284, 32
        %v1287 = vpop.permute.xlu0 %1286
        %v1289 = vmul.f32 %v1271, %v1287
        %1291 = vrot.lane.b32.xlu0 %v1289, 64
        %v1292 = vpop.permute.xlu0 %1291
        %1295 = vrot.lane.b32.xlu0 %v1206, 64
        %v1296 = vpop.permute.xlu0 %1295
        %v1298 = vsel %vm335, %v1292, %v1296
        %v1299 = vpack.c.bf16 %v1298, %v1298
        %v1301 = vsel %vm365, %v1299, 0
        %1303 = vmatpush.bf16.msra.mxu0 0
        %1304 = vmatpush.bf16.msra.mxu0 0
        %1305 = vmatpush.bf16.msra.mxu0 0
        %1306 = vmatpush.bf16.msra.mxu0 0
        %1307 = vmatpush.bf16.msra.mxu0 %v460
        %1308 = vmatpush.bf16.msra.mxu0 %v458
        %1309 = vmatpush.bf16.msra.mxu0 %v456
        %1310 = vmatpush.bf16.msra.mxu0 %v454
        %1311 = vmatmul.bf16.gmra.mxu0 %v1301
        %v1312 = vpop.f32.mrf.mxu0
        %v1313 = vadd.f32 %v426, %v1312
        %v1314 = vpop.f32.mrf.mxu0
        %1315 = vdwg.mxu0
        %1316 = vmatpush.bf16.msra.mxu0 0
        %1317 = vmatpush.bf16.msra.mxu0 0
        %1318 = vmatpush.bf16.msra.mxu0 0
        %1319 = vmatpush.bf16.msra.mxu0 0
        %1320 = vmatpush.bf16.msra.mxu0 %v461
        %1321 = vmatpush.bf16.msra.mxu0 %v459
        %1322 = vmatpush.bf16.msra.mxu0 %v457
        %1323 = vmatpush.bf16.msra.mxu0 %v455
        %1324 = vmatmul.bf16.gmra.mxu0 %v1301
        %v1325 = vpop.f32.mrf.mxu0
        %v1326 = vadd.f32 %v427, %v1325
        %v1327 = vpop.f32.mrf.mxu0
        %1328 = vdwg.mxu0
        %v1329 = vxor.u32 %v1313, 2147483648
        %v1330 = vmul.f32 %v1329, 1.442695
        %v1331 = vpow.pop %v1330
        %v1332 = vadd.f32 %v1331, 1.0
        %v1333 = vrcp.pop %v1332
        %v1334 = vmul.f32 %v1332, %v1333
        %v1335 = vsub.f32 1.0, %v1334
        %v1336 = vmul.f32 %v1333, %v1335
        %v1337 = vadd.f32 %v1333, %v1336
        %vm1338 = vweird.f32 %v1332
        %vm1339 = vweird.f32 %v1333
        %vm1340 = vmor %vm1338, %vm1339
        %v1341 = vsel %vm1340, %v1333, %v1337
        %v1342 = vand.u32 2147483647, %v1332
        %vm1343 = vcmp.eq.f32.partialorder %v1342, 8.507059e+37
        %v1344 = vand.u32 %v1332, 2147483648
        %v1345 = vor.u32 1.1754944e-38, %v1344
        %v1346 = vsel %vm1343, %v1345, %v1341
        %v1347 = vmul.f32 1.0, %v1346
        %v1348 = vtanh.pop %v1326
        %1350 = vrot.lane.b32.xlu0 %v1213, 64
        %v1351 = vpop.permute.xlu0 %1350
        %v1353 = vmul.f32 %v1347, %v1351
        %v1354 = vmul.f32 %v1347, %v1348
        %1356 = vrot.lane.b32.xlu0 %v1354, 32
        %v1357 = vpop.permute.xlu0 %1356
        %v1359 = vadd.f32 %v1353, %v1357
        %v1360 = vtanh.pop %v1359
        %1362 = vrot.lane.b32.xlu0 %v1360, 32
        %v1363 = vpop.permute.xlu0 %1362
        %v1365 = vmul.f32 %v1347, %v1363
        %1367 = vrot.lane.b32.xlu0 %v1365, 32
        %v1368 = vpop.permute.xlu0 %1367
        %v1370 = vmul.f32 %v1347, %v1368
        %v1371 = vsub.f32 1.0, %v1347
        %v1372 = vmul.f32 %v1371, %v1206
        %v1373 = vadd.f32 %v1370, %v1372
        %1375 = vrot.lane.b32.xlu0 %v1359, 64
        %v1376 = vpop.permute.xlu0 %1375
        %v1378 = vmul.f32 %v1347, %v1376
        %v1379 = vmul.f32 %v1371, %v1213
        %v1380 = vadd.f32 %v1378, %v1379
        %1382 = vrot.lane.b32.xlu0 %v1347, 37
        %v1383 = vpop.permute.xlu0 %1382
        %vm1385 = vcmask 48168
        %1386 = vst.msk [vmem:[%s314] sm:$0xff] %vm1385, %v1383
        %1388 = vrot.lane.b32.xlu0 %v1371, 96
        %v1389 = vpop.permute.xlu0 %1388
        %v1391 = vmul.f32 %v1289, %v1389
        %1392 = vrot.lane.b32.xlu0 %v1371, 64
        %v1393 = vpop.permute.xlu0 %1392
        %v1395 = vmul.f32 %v1283, %v1393
        %s1396 = scalar_lea.vmem %s267, 48 [#allocation2]
        %v1397 = vld [vmem:[%s1396] sm:$0xff]
        %1399 = vrot.lane.b32.xlu0 %v1391, 96
        %v1400 = vpop.permute.xlu0 %1399
        %v1402 = vsel %vm335, %v1397, %v1400
        %v1403 = vpack.c.bf16 %v1402, %v1402
        %v1405 = vsel %vm365, %v1403, 0
        %1407 = vmatpush.bf16.msra.mxu0 0
        %1408 = vmatpush.bf16.msra.mxu0 0
        %1409 = vmatpush.bf16.msra.mxu0 0
        %1410 = vmatpush.bf16.msra.mxu0 0
        %1411 = vmatpush.bf16.msra.mxu0 %v360
        %1412 = vmatpush.bf16.msra.mxu0 %v359
        %1413 = vmatpush.bf16.msra.mxu0 %v358
        %1414 = vmatpush.bf16.msra.mxu0 %v357
        %1415 = vmatmul.bf16.gmra.mxu0 %v1405
        %v1416 = vpop.f32.mrf.mxu0
        %v1417 = vadd.f32 %v339, %v1416
        %v1418 = vpop.f32.mrf.mxu0
        %1419 = vdwg.mxu0
        %v1420 = vxor.u32 %v1417, 2147483648
        %v1421 = vmul.f32 %v1420, 1.442695
        %v1422 = vpow.pop %v1421
        %v1423 = vadd.f32 %v1422, 1.0
        %v1424 = vrcp.pop %v1423
        %v1425 = vmul.f32 %v1423, %v1424
        %v1426 = vsub.f32 1.0, %v1425
        %v1427 = vmul.f32 %v1424, %v1426
        %v1428 = vadd.f32 %v1424, %v1427
        %vm1429 = vweird.f32 %v1423
        %vm1430 = vweird.f32 %v1424
        %vm1431 = vmor %vm1429, %vm1430
        %v1432 = vsel %vm1431, %v1424, %v1428
        %v1433 = vand.u32 2147483647, %v1423
        %vm1434 = vcmp.eq.f32.partialorder %v1433, 8.507059e+37
        %v1435 = vand.u32 %v1423, 2147483648
        %v1436 = vor.u32 1.1754944e-38, %v1435
        %v1437 = vsel %vm1434, %v1436, %v1432
        %v1438 = vmul.f32 1.0, %v1437
        %v1439 = vtanh.pop %v1417
        %v1440 = vmul.f32 %v1438, %v1395
        %1442 = vrot.lane.b32.xlu0 %v1439, 32
        %v1443 = vpop.permute.xlu0 %1442
        %v1445 = vmul.f32 %v1438, %v1443
        %1447 = vrot.lane.b32.xlu0 %v1445, 32
        %v1448 = vpop.permute.xlu0 %1447
        %v1450 = vadd.f32 %v1440, %v1448
        %v1451 = vtanh.pop %v1450
        %1453 = vrot.lane.b32.xlu0 %v1451, 32
        %v1454 = vpop.permute.xlu0 %1453
        %v1456 = vmul.f32 %v1438, %v1454
        %1458 = vrot.lane.b32.xlu0 %v1456, 64
        %v1459 = vpop.permute.xlu0 %1458
        %1462 = vrot.lane.b32.xlu0 %v1373, 64
        %v1463 = vpop.permute.xlu0 %1462
        %v1465 = vsel %vm335, %v1459, %v1463
        %v1466 = vpack.c.bf16 %v1465, %v1465
        %v1468 = vsel %vm365, %v1466, 0
        %1470 = vmatpush.bf16.msra.mxu0 0
        %1471 = vmatpush.bf16.msra.mxu0 0
        %1472 = vmatpush.bf16.msra.mxu0 0
        %1473 = vmatpush.bf16.msra.mxu0 0
        %1474 = vmatpush.bf16.msra.mxu0 %v460
        %1475 = vmatpush.bf16.msra.mxu0 %v458
        %1476 = vmatpush.bf16.msra.mxu0 %v456
        %1477 = vmatpush.bf16.msra.mxu0 %v454
        %1478 = vmatmul.bf16.gmra.mxu0 %v1468
        %v1479 = vpop.f32.mrf.mxu0
        %v1480 = vadd.f32 %v426, %v1479
        %v1481 = vpop.f32.mrf.mxu0
        %1482 = vdwg.mxu0
        %1483 = vmatpush.bf16.msra.mxu0 0
        %1484 = vmatpush.bf16.msra.mxu0 0
        %1485 = vmatpush.bf16.msra.mxu0 0
        %1486 = vmatpush.bf16.msra.mxu0 0
        %1487 = vmatpush.bf16.msra.mxu0 %v461
        %1488 = vmatpush.bf16.msra.mxu0 %v459
        %1489 = vmatpush.bf16.msra.mxu0 %v457
        %1490 = vmatpush.bf16.msra.mxu0 %v455
        %1491 = vmatmul.bf16.gmra.mxu0 %v1468
        %v1492 = vpop.f32.mrf.mxu0
        %v1493 = vadd.f32 %v427, %v1492
        %v1494 = vpop.f32.mrf.mxu0
        %1495 = vdwg.mxu0
        %v1496 = vxor.u32 %v1480, 2147483648
        %v1497 = vmul.f32 %v1496, 1.442695
        %v1498 = vpow.pop %v1497
        %v1499 = vadd.f32 %v1498, 1.0
        %v1500 = vrcp.pop %v1499
        %v1501 = vmul.f32 %v1499, %v1500
        %v1502 = vsub.f32 1.0, %v1501
        %v1503 = vmul.f32 %v1500, %v1502
        %v1504 = vadd.f32 %v1500, %v1503
        %vm1505 = vweird.f32 %v1499
        %vm1506 = vweird.f32 %v1500
        %vm1507 = vmor %vm1505, %vm1506
        %v1508 = vsel %vm1507, %v1500, %v1504
        %v1509 = vand.u32 2147483647, %v1499
        %vm1510 = vcmp.eq.f32.partialorder %v1509, 8.507059e+37
        %v1511 = vand.u32 %v1499, 2147483648
        %v1512 = vor.u32 1.1754944e-38, %v1511
        %v1513 = vsel %vm1510, %v1512, %v1508
        %v1514 = vmul.f32 1.0, %v1513
        %v1515 = vtanh.pop %v1493
        %1517 = vrot.lane.b32.xlu0 %v1380, 64
        %v1518 = vpop.permute.xlu0 %1517
        %v1520 = vmul.f32 %v1514, %v1518
        %v1521 = vmul.f32 %v1514, %v1515
        %1523 = vrot.lane.b32.xlu0 %v1521, 32
        %v1524 = vpop.permute.xlu0 %1523
        %v1526 = vadd.f32 %v1520, %v1524
        %v1527 = vtanh.pop %v1526
        %1529 = vrot.lane.b32.xlu0 %v1527, 32
        %v1530 = vpop.permute.xlu0 %1529
        %v1532 = vmul.f32 %v1514, %v1530
        %1534 = vrot.lane.b32.xlu0 %v1532, 32
        %v1535 = vpop.permute.xlu0 %1534
        %v1537 = vmul.f32 %v1514, %v1535
        %v1538 = vsub.f32 1.0, %v1514
        %v1539 = vmul.f32 %v1538, %v1373
        %v1540 = vadd.f32 %v1537, %v1539
        %1542 = vrot.lane.b32.xlu0 %v1526, 64
        %v1543 = vpop.permute.xlu0 %1542
        %v1545 = vmul.f32 %v1514, %v1543
        %v1546 = vmul.f32 %v1538, %v1380
        %v1547 = vadd.f32 %v1545, %v1546
        %1549 = vrot.lane.b32.xlu0 %v1514, 38
        %v1550 = vpop.permute.xlu0 %1549
        %vm1552 = vcmask 56368
        %1553 = vst.msk [vmem:[%s314] sm:$0xff] %vm1552, %v1550
        %1555 = vrot.lane.b32.xlu0 %v1538, 96
        %v1556 = vpop.permute.xlu0 %1555
        %v1558 = vmul.f32 %v1456, %v1556
        %1559 = vrot.lane.b32.xlu0 %v1538, 64
        %v1560 = vpop.permute.xlu0 %1559
        %v1562 = vmul.f32 %v1450, %v1560
        %s1563 = scalar_lea.vmem %s267, 56 [#allocation2]
        %v1564 = vld [vmem:[%s1563] sm:$0xff]
        %1566 = vrot.lane.b32.xlu0 %v1558, 96
        %v1567 = vpop.permute.xlu0 %1566
        %v1569 = vsel %vm335, %v1564, %v1567
        %v1570 = vpack.c.bf16 %v1569, %v1569
        %v1572 = vsel %vm365, %v1570, 0
        %1574 = vmatpush.bf16.msra.mxu0 0
        %1575 = vmatpush.bf16.msra.mxu0 0
        %1576 = vmatpush.bf16.msra.mxu0 0
        %1577 = vmatpush.bf16.msra.mxu0 0
        %1578 = vmatpush.bf16.msra.mxu0 %v360
        %1579 = vmatpush.bf16.msra.mxu0 %v359
        %1580 = vmatpush.bf16.msra.mxu0 %v358
        %1581 = vmatpush.bf16.msra.mxu0 %v357
        %1582 = vmatmul.bf16.gmra.mxu0 %v1572
        %v1583 = vpop.f32.mrf.mxu0
        %v1584 = vadd.f32 %v339, %v1583
        %v1585 = vpop.f32.mrf.mxu0
        %1586 = vdwg.mxu0
        %v1587 = vxor.u32 %v1584, 2147483648
        %v1588 = vmul.f32 %v1587, 1.442695
        %v1589 = vpow.pop %v1588
        %v1590 = vadd.f32 %v1589, 1.0
        %v1591 = vrcp.pop %v1590
        %v1592 = vmul.f32 %v1590, %v1591
        %v1593 = vsub.f32 1.0, %v1592
        %v1594 = vmul.f32 %v1591, %v1593
        %v1595 = vadd.f32 %v1591, %v1594
        %vm1596 = vweird.f32 %v1590
        %vm1597 = vweird.f32 %v1591
        %vm1598 = vmor %vm1596, %vm1597
        %v1599 = vsel %vm1598, %v1591, %v1595
        %v1600 = vand.u32 2147483647, %v1590
        %vm1601 = vcmp.eq.f32.partialorder %v1600, 8.507059e+37
        %v1602 = vand.u32 %v1590, 2147483648
        %v1603 = vor.u32 1.1754944e-38, %v1602
        %v1604 = vsel %vm1601, %v1603, %v1599
        %v1605 = vmul.f32 1.0, %v1604
        %v1606 = vtanh.pop %v1584
        %v1607 = vmul.f32 %v1605, %v1562
        %1609 = vrot.lane.b32.xlu0 %v1606, 32
        %v1610 = vpop.permute.xlu0 %1609
        %v1612 = vmul.f32 %v1605, %v1610
        %1614 = vrot.lane.b32.xlu0 %v1612, 32
        %v1615 = vpop.permute.xlu0 %1614
        %v1617 = vadd.f32 %v1607, %v1615
        %v1618 = vtanh.pop %v1617
        %1620 = vrot.lane.b32.xlu0 %v1618, 32
        %v1621 = vpop.permute.xlu0 %1620
        %v1623 = vmul.f32 %v1605, %v1621
        %1625 = vrot.lane.b32.xlu0 %v1623, 64
        %v1626 = vpop.permute.xlu0 %1625
        %1629 = vrot.lane.b32.xlu0 %v1540, 64
        %v1630 = vpop.permute.xlu0 %1629
        %v1632 = vsel %vm335, %v1626, %v1630
        %v1633 = vpack.c.bf16 %v1632, %v1632
        %v1635 = vsel %vm365, %v1633, 0
        %1637 = vmatpush.bf16.msra.mxu0 0
        %1638 = vmatpush.bf16.msra.mxu0 0
        %1639 = vmatpush.bf16.msra.mxu0 0
        %1640 = vmatpush.bf16.msra.mxu0 0
        %1641 = vmatpush.bf16.msra.mxu0 %v460
        %1642 = vmatpush.bf16.msra.mxu0 %v458
        %1643 = vmatpush.bf16.msra.mxu0 %v456
        %1644 = vmatpush.bf16.msra.mxu0 %v454
        %1645 = vmatmul.bf16.gmra.mxu0 %v1635
        %v1646 = vpop.f32.mrf.mxu0
        %v1647 = vadd.f32 %v426, %v1646
        %v1648 = vpop.f32.mrf.mxu0
        %1649 = vdwg.mxu0
        %1650 = vmatpush.bf16.msra.mxu0 0
        %1651 = vmatpush.bf16.msra.mxu0 0
        %1652 = vmatpush.bf16.msra.mxu0 0
        %1653 = vmatpush.bf16.msra.mxu0 0
        %1654 = vmatpush.bf16.msra.mxu0 %v461
        %1655 = vmatpush.bf16.msra.mxu0 %v459
        %1656 = vmatpush.bf16.msra.mxu0 %v457
        %1657 = vmatpush.bf16.msra.mxu0 %v455
        %1658 = vmatmul.bf16.gmra.mxu0 %v1635
        %v1659 = vpop.f32.mrf.mxu0
        %v1660 = vadd.f32 %v427, %v1659
        %v1661 = vpop.f32.mrf.mxu0
        %1662 = vdwg.mxu0
        %v1663 = vxor.u32 %v1647, 2147483648
        %v1664 = vmul.f32 %v1663, 1.442695
        %v1665 = vpow.pop %v1664
        %v1666 = vadd.f32 %v1665, 1.0
        %v1667 = vrcp.pop %v1666
        %v1668 = vmul.f32 %v1666, %v1667
        %v1669 = vsub.f32 1.0, %v1668
        %v1670 = vmul.f32 %v1667, %v1669
        %v1671 = vadd.f32 %v1667, %v1670
        %vm1672 = vweird.f32 %v1666
        %vm1673 = vweird.f32 %v1667
        %vm1674 = vmor %vm1672, %vm1673
        %v1675 = vsel %vm1674, %v1667, %v1671
        %v1676 = vand.u32 2147483647, %v1666
        %vm1677 = vcmp.eq.f32.partialorder %v1676, 8.507059e+37
        %v1678 = vand.u32 %v1666, 2147483648
        %v1679 = vor.u32 1.1754944e-38, %v1678
        %v1680 = vsel %vm1677, %v1679, %v1675
        %v1681 = vmul.f32 1.0, %v1680
        %v1682 = vtanh.pop %v1660
        %1684 = vrot.lane.b32.xlu0 %v1547, 64
        %v1685 = vpop.permute.xlu0 %1684
        %v1687 = vmul.f32 %v1681, %v1685
        %v1688 = vmul.f32 %v1681, %v1682
        %1690 = vrot.lane.b32.xlu0 %v1688, 32
        %v1691 = vpop.permute.xlu0 %1690
        %v1693 = vadd.f32 %v1687, %v1691
        %v1694 = vtanh.pop %v1693
        %1696 = vrot.lane.b32.xlu0 %v1694, 32
        %v1697 = vpop.permute.xlu0 %1696
        %v1699 = vmul.f32 %v1681, %v1697
        %1701 = vrot.lane.b32.xlu0 %v1699, 32
        %v1702 = vpop.permute.xlu0 %1701
        %v1704 = vmul.f32 %v1681, %v1702
        %v1705 = vsub.f32 1.0, %v1681
        %v1706 = vmul.f32 %v1705, %v1540
        %v1707 = vadd.f32 %v1704, %v1706
        %1709 = vrot.lane.b32.xlu0 %v1681, 39
        %v1710 = vpop.permute.xlu0 %1709
        %vm1712 = vcmask 64568
        %1713 = vst.msk [vmem:[%s314] sm:$0xff] %vm1712, %v1710
        %1715 = vrot.lane.b32.xlu0 %v1707, 32
        %v1716 = vpop.permute.xlu0 %1715
        %1718 = vst.msk [vmem:[%s304] sm:$0xff] %vm335, %v1716
        %s1719 = sand.u32 %s143, 1
        %s1720 = scalar_lea.sflag [#allocation4], %s1719
        %s1721 = sand.u32 %s143, 1
        %s1722 = smul.addr %s1721, 8
        %s1723 = scalar_lea.vmem [#allocation8], %s1722
        %p1724 = scmp.lt.s32.totalorder %s25, 1
        %s1725 = scalar_select %p1724, %s25, 1
        %s1726 = smul.addr %s1725, 8
        %s1727 = scalar_lea.vmem %s6, %s1726
        // Predicated region
        $region53: #{tpu_custom_call.1} parent=39 // pred_check
          %p1728 = pneg %p153
        $region54: #{tpu_custom_call.1} parent=39 // pred_check_branch
          %1730 = sbr.rel (%p1728) target = $region56
        $region55: #{tpu_custom_call.1} parent=39 // pred_region
          %1732 = vsyncadd %s1720, 0
          %s1733 = smul.addr %s25, 8
          %s1734 = scalar_lea.hbm %s5, %s1733
          %s1736 = sshll.u32 %s1723, 4
          %s1737 = int_to_ptr.vmem [resolvable:$true] %s1736
          %s1738 = sshll.u32 %s1734, 4
          %s1739 = int_to_ptr.hbm [resolvable:$true] %s1738
          %1741 = dma.vmem_to_hbm [thread:$0]  %s1737, 128, %s1739, %s1720
        $region56: #{tpu_custom_call.1} parent=39 // pred_fallthru
          _
        // Predicated region
        $region57: #{tpu_custom_call.1} parent=39 // pred_check
          %p1742 = pneg %p179
        $region58: #{tpu_custom_call.1} parent=39 // pred_check_branch
          %1744 = sbr.rel (%p1742) target = $region60
        $region59: #{tpu_custom_call.1} parent=39 // pred_region
          _
        $region60: #{tpu_custom_call.1} parent=39 // pred_fallthru
          _
      $region40: #{tpu_custom_call.1} parent=5 // pred_fallthru
        _
      %p1745 = scmp.le.s32.totalorder 2, %s20
      // Predicated region
      $region61: #{tpu_custom_call.1} parent=5 // pred_check
        %p1746 = pneg %p1745
      $region62: #{tpu_custom_call.1} parent=5 // pred_check_branch
        %1748 = sbr.rel (%p1746) target = $region64
      $region63: #{tpu_custom_call.1} parent=5 // pred_region
        %s1749 = ssub.s32 %s20, 2
        // Predicated region
        $region65: #{tpu_custom_call.1} parent=63 // pred_check
          %p1750 = pneg %p159
        $region66: #{tpu_custom_call.1} parent=63 // pred_check_branch
          %1752 = sbr.rel (%p1750) target = $region68
        $region67: #{tpu_custom_call.1} parent=63 // pred_region
          %s1753 = sand.u32 %s144, 1
          %s1754 = scalar_lea.sflag [#allocation4], %s1753
          %s1755 = sand.u32 %s144, 1
          %s1756 = smul.addr %s1755, 8
          %s1757 = scalar_lea.vmem [#allocation8], %s1756
          %1759 = dma.done %s1754, 128
        $region68: #{tpu_custom_call.1} parent=63 // pred_fallthru
          _
        // Predicated region
        $region69: #{tpu_custom_call.1} parent=63 // pred_check
          %p1760 = pneg %p185
        $region70: #{tpu_custom_call.1} parent=63 // pred_check_branch
          %1762 = sbr.rel (%p1760) target = $region72
        $region71: #{tpu_custom_call.1} parent=63 // pred_region
          %p1763 = scmp.lt.s32.totalorder %s26, 1
          %s1764 = scalar_select %p1763, %s26, 1
          %s1765 = smul.addr %s1764, 8
          %s1766 = scalar_lea.vmem %s6, %s1765
        $region72: #{tpu_custom_call.1} parent=63 // pred_fallthru
          _
      $region64: #{tpu_custom_call.1} parent=5 // pred_fallthru
        _
    $region6: #{tpu_custom_call.1} parent=1 // loop_footer
      %s24 = sadd.s32 1, %s20
    $region7: #{tpu_custom_call.1} parent=1 // loop_footer_branch
      %19 = sbr.rel target = $region3
    $region8: #{tpu_custom_call.1} parent=1 // loop_exit
      _
    %1767 = vsyncpa [#allocation3], 1
    %s1768 = scalar_lea.sflag [#allocation3], 1
    %1769 = vsyncpa %s1768, 1
    %1770 = vsyncpa [#allocation6], 1
    %1771 = vsyncpa [#allocation4], 1
    %s1772 = scalar_lea.sflag [#allocation4], 1
    %1773 = vsyncpa %s1772, 1

</llo_original>
